<compile_context>
chip_gen: v6e
topology: v6e:2x2x1
jax: 0.10.0
libtpu: 0.0.40
codegen_flags: <defaults>
</compile_context>

<pallas_src>
import math
import functools

import jax
import jax.numpy as jnp
from jax.experimental import pallas as pl
from jax.experimental.pallas import tpu as pltpu


def _perm_0213(x, eq):
    """(a, b, c, d) -> (a, c, b, d). Prefer the lane-layout-aware pltpu.einshape;
    fall back to a plain transpose if it is unavailable or rejects the equation."""
    if hasattr(pltpu, "einshape"):
        try:
            return pltpu.einshape(eq, x)
        except Exception:
            pass
    return jnp.transpose(x, (0, 2, 1, 3))


def _mab_kernel(q_ref, k_ref,
                wqt_ref, bq_ref, wkvt_ref, bkv_ref, wot_ref, bo_ref,
                o_ref,
                *, num_heads: int, tb: int, nq: int, nk: int, dim_v: int):
    """One grid step = TB fused batch elements: projections, head-batched softmax
    attention with residual, and the output MLP, all in VMEM / registers."""
    hd = dim_v // num_heads
    inv_scale = 1.0 / math.sqrt(dim_v)   # module scales by sqrt(dim_V), not sqrt(head_dim)
    mm = wqt_ref.dtype                   # MXU operand dtype (bf16 by default)

    q_in = q_ref[...]                    # (TB*Nq, dim_Q), already in mm dtype (wrapper cast)
    k_in = k_ref[...]                    # (TB*Nk, dim_K), already in mm dtype

    # Projections: y = x @ W^T + b (weights pre-transposed in the wrapper).
    # fc_k / fc_v are fused into a single (dim_K, 2*dim_V) matmul; biases are
    # added once per grid step; accumulation is f32.
    qp = jnp.dot(q_in, wqt_ref[...], preferred_element_type=jnp.float32) + bq_ref[...]
    kv = jnp.dot(k_in, wkvt_ref[...], preferred_element_type=jnp.float32) + bkv_ref[...]
    kp = kv[:, :dim_v]                   # free split when dim_V % 128 == 0
    vp = kv[:, dim_v:]

    # Head-batched layout: (TB*n, dim_V) -> (TB*H, n, hd). Relayout done in f32,
    # cast to the MXU dtype only on the final contiguous operand.
    def to_heads(x2d_f32, n):
        x4 = x2d_f32.reshape(tb, n, num_heads, hd)
        x4 = _perm_0213(x4, "bnhd->bhnd")
        return x4.reshape(tb * num_heads, n, hd).astype(mm)

    qh = to_heads(qp, nq)
    kh = to_heads(kp * inv_scale, nk)    # 1/sqrt(dim_V) folded once into K (scores only)
    vh = to_heads(vp, nk)

    # Scores + softmax + context, batched over (TB*H) in one einsum pair.
    s = jnp.einsum("bqd,bkd->bqk", qh, kh, preferred_element_type=jnp.float32)
    s = s - jnp.max(s, axis=-1, keepdims=True)
    e = jnp.exp(s)
    attn = e * pl.reciprocal(jnp.sum(e, axis=-1, keepdims=True), approx=True)
    ctx = jnp.einsum("bqk,bkd->bqd", attn.astype(mm), vh,
                     preferred_element_type=jnp.float32)

    # Back to the lane-dense (TB*Nq, dim_V) layout; residual uses the f32 projected Q.
    ctx4 = _perm_0213(ctx.reshape(tb, num_heads, nq, hd), "bhnd->bnhd")
    o_mid = qp + ctx4.reshape(tb * nq, dim_v)

    # O = O + relu(fc_o(O)); single dense store of the finished block.
    fco = jnp.dot(o_mid.astype(mm), wot_ref[...], preferred_element_type=jnp.float32) + bo_ref[...]
    o_ref[...] = (o_mid + jnp.maximum(fco, 0.0)).astype(o_ref.dtype)


_VMEM_LIMIT_BYTES = 48 * 1024 * 1024     # explicit scoped-VMEM limit, below v7x's 64 MiB


def _vmem_budget_bytes(cap_fraction=0.55, default_capacity=64 * 1024 * 1024):
    """Per-step VMEM budget; generation-aware when get_tpu_info is available."""
    capacity = None
    try:
        capacity = getattr(pltpu.get_tpu_info(), "vmem_capacity_bytes", None)
    except Exception:
        capacity = None
    if not capacity:
        capacity = default_capacity       # conservative: assume the smallest part (v7x)
    return int(capacity * cap_fraction)


def _step_vmem_bytes(tb, nq, nk, nh, dim_q, dim_k, dim_v, in_bytes):
    """Rough VMEM footprint of one grid step: double-buffered streamed I/O,
    (double-buffered) constant weights, and live in-kernel temporaries."""
    rq, rk = tb * nq, tb * nk
    stream = 2 * (rq * dim_q + rk * dim_k) * in_bytes             # pipelined input slabs
    outbuf = 2 * rq * dim_v * 4                                   # pipelined output slab
    weights = 2 * ((dim_q + 2 * dim_k + dim_v) * dim_v * in_bytes + 4 * dim_v * 4)
    temps = (4 * (3 * rq + 3 * rk) * dim_v                        # f32 projections/residual/fc_o
             + 3 * 4 * tb * nh * nq * nk                          # f32 scores / exp / attn
             + (2 * rq + 2 * rk) * dim_v * in_bytes)              # mm-dtype head-batched copies
    return stream + outbuf + weights + temps


def _pick_batch_tile(B, nq, nk, nh, dim_q, dim_k, dim_v, in_bytes,
                     budget_bytes, max_rows=2048):
    """Largest divisor TB of B that (a) keeps both row slabs 8-aligned (or spans the
    full batch), (b) fits the VMEM budget, and (c) when possible leaves >=2 grid
    steps so both v7x TensorCores get work and input/output pipelining can overlap."""
    def layout_ok(t):
        return t == B or ((t * nq) % 8 == 0 and (t * nk) % 8 == 0)
    cands = [t for t in range(1, B + 1) if B % t == 0 and layout_ok(t)]
    fits = [t for t in cands
            if t * max(nq, nk) <= max(max_rows, max(nq, nk))
            and _step_vmem_bytes(t, nq, nk, nh, dim_q, dim_k, dim_v, in_bytes) <= budget_bytes]
    if not fits:
        return min(cands)
    multi = [t for t in fits if B // t >= 2]
    return max(multi) if multi else max(fits)


def mab_forward(Q, K, params, *, num_heads, batch_tile=None, mm_dtype=jnp.bfloat16):
    """Pallas MAB forward. Q: (B, Nq, dim_Q), K: (B, Nk, dim_K) -> (B, Nq, dim_V)."""
    B, Nq, dim_Q = Q.shape
    _, Nk, dim_K = K.shape
    dim_V = params["wq"].shape[0]
    assert dim_V % num_heads == 0

    in_bytes = jnp.dtype(mm_dtype).itemsize
    if batch_tile is None:
        budget = min(_VMEM_LIMIT_BYTES, _vmem_budget_bytes())
        TB = _pick_batch_tile(B, Nq, Nk, num_heads, dim_Q, dim_K, dim_V, in_bytes, budget)
    else:
        TB = batch_tile
    assert B % TB == 0

    # Pre-transpose weights to (in, out) so the kernel feeds the MXU directly;
    # fuse fc_k|fc_v into one (dim_K, 2*dim_V) weight. Matmul operands in mm_dtype
    # (bf16 by default), biases stay f32.
    wqt = params["wq"].T.astype(mm_dtype)
    wkvt = jnp.concatenate([params["wk"].T, params["wv"].T], axis=1).astype(mm_dtype)
    wot = params["wo"].T.astype(mm_dtype)
    bq = params["bq"].reshape(1, dim_V).astype(jnp.float32)
    bkv = jnp.concatenate([params["bk"], params["bv"]]).reshape(1, 2 * dim_V).astype(jnp.float32)
    bo = params["bo"].reshape(1, dim_V).astype(jnp.float32)

    # Flatten (batch, seq) into tall 2-D slabs and cast to the MXU dtype in the
    # wrapper: halves the streamed HBM->VMEM bytes, bit-identical matmul operands.
    Q2 = Q.reshape(B * Nq, dim_Q).astype(mm_dtype)
    K2 = K.reshape(B * Nk, dim_K).astype(mm_dtype)

    kernel = functools.partial(_mab_kernel, num_heads=num_heads, tb=TB,
                               nq=Nq, nk=Nk, dim_v=dim_V)

    def _const(a):
        # Grid-invariant operand (weights / biases); never re-DMA'd across steps.
        # NOTE: could be single-buffered via pipeline_mode=pl.Buffered(1) to free
        # one weight footprint of VMEM; the 2x cost is already accounted for in
        # the TB budget above, so we keep the default pipelining for portability.
        return pl.BlockSpec(a.shape, lambda b: (0,) * a.ndim)

    out2 = pl.pallas_call(
        kernel,
        out_shape=jax.ShapeDtypeStruct((B * Nq, dim_V), Q.dtype),
        grid_spec=pltpu.PrefetchScalarGridSpec(
            num_scalar_prefetch=0,
            grid=(B // TB,),
            in_specs=[
                pl.BlockSpec((TB * Nq, dim_Q), lambda b: (b, 0)),   # Q slab (TB batches)
                pl.BlockSpec((TB * Nk, dim_K), lambda b: (b, 0)),   # K slab (TB batches)
                _const(wqt), _const(bq),                            # fc_q
                _const(wkvt), _const(bkv),                          # fused fc_k | fc_v
                _const(wot), _const(bo),                            # fc_o
            ],
            out_specs=pl.BlockSpec((TB * Nq, dim_V), lambda b: (b, 0)),
        ),
        compiler_params=pltpu.CompilerParams(
            dimension_semantics=("parallel",),
            vmem_limit_bytes=_VMEM_LIMIT_BYTES),
    )(Q2, K2, wqt, bq, wkvt, bkv, wot, bo)

    return out2.reshape(B, Nq, dim_V)


def mab_reference(Q, K, params, *, num_heads):
    """Pure-JAX f32 reference mirroring the PyTorch forward exactly (bn=False)."""
    dim_V = params["wq"].shape[0]
    Qp = Q @ params["wq"].T + params["bq"]
    Kp = K @ params["wk"].T + params["bk"]
    Vp = K @ params["wv"].T + params["bv"]
    split = lambda X: jnp.concatenate(jnp.split(X, num_heads, axis=2), axis=0)
    Q_, K_, V_ = split(Qp), split(Kp), split(Vp)
    A = jax.nn.softmax(jnp.einsum("bqd,bkd->bqk", Q_, K_) / math.sqrt(dim_V), axis=2)
    O = Q_ + jnp.einsum("bqk,bkd->bqd", A, V_)
    O = jnp.concatenate(jnp.split(O, num_heads, axis=0), axis=2)
    O = O + jax.nn.relu(O @ params["wo"].T + params["bo"])
    return O


def init_params(key, dim_Q, dim_K, dim_V):
    """Deterministic synthetic parameters (nn.Linear shapes: weight (out, in))."""
    ks = jax.random.split(key, 8)
    def lin(kw, kb, d_in, d_out):
        bound = 1.0 / math.sqrt(d_in)
        w = jax.random.uniform(kw, (d_out, d_in), jnp.float32, -bound, bound)
        b = jax.random.uniform(kb, (d_out,), jnp.float32, -bound, bound)
        return w, b
    wq, bq = lin(ks[0], ks[1], dim_Q, dim_V)
    wk, bk = lin(ks[2], ks[3], dim_K, dim_V)
    wv, bv = lin(ks[4], ks[5], dim_K, dim_V)
    wo, bo = lin(ks[6], ks[7], dim_V, dim_V)
    # TODO(synk): BatchNorm1d layers (bn1/bn2/bn3, ln0/ln1) are constructed in
    # __init__ but unused in forward when bn=False; not implemented here.
    return dict(wq=wq, bq=bq, wk=wk, bk=bk, wv=wv, bv=bv, wo=wo, bo=bo)


if __name__ == "__main__":
    B, Nq, Nk = 2, 8, 10
    dim_Q, dim_K, dim_V, num_heads = 16, 24, 32, 4

    key = jax.random.PRNGKey(0)
    kq, kk, kparam = jax.random.split(key, 3)
    Q = jax.random.normal(kq, (B, Nq, dim_Q), jnp.float32)
    K = jax.random.normal(kk, (B, Nk, dim_K), jnp.float32)
    params = init_params(kparam, dim_Q, dim_K, dim_V)

    ref = mab_reference(Q, K, params, num_heads=num_heads)

    # Structural sanity check with f32 MXU operands (only drift source: the EUP
    # approximate reciprocal in the softmax denominator -> looser than 1e-5).
    out_f32 = jax.block_until_ready(
        mab_forward(Q, K, params, num_heads=num_heads, mm_dtype=jnp.float32))
    assert out_f32.shape == (B, Nq, dim_V)
    assert jnp.allclose(out_f32, ref, atol=2e-2, rtol=2e-2), "f32 path mismatch vs reference"

    # Default perf path: bf16 MXU operands, f32 accumulation & element-wise math.
    out = jax.block_until_ready(mab_forward(Q, K, params, num_heads=num_heads))
    assert out.shape == (B, Nq, dim_V)
    assert jnp.allclose(out, ref, atol=1e-1, rtol=5e-2), "bf16 path mismatch vs reference"

    print("KERNEL_OK")
</pallas_src>

<mosaic_0001>
module attributes {stable_mosaic.version = 11 : i64} {
  func.func @_mab_kernel(%arg0: i32, %arg1: memref<16x16xf32, #tpu.memory_space<vmem>>, %arg2: memref<20x24xf32, #tpu.memory_space<vmem>>, %arg3: memref<16x32xf32, #tpu.memory_space<vmem>>, %arg4: memref<1x32xf32, #tpu.memory_space<vmem>>, %arg5: memref<24x64xf32, #tpu.memory_space<vmem>>, %arg6: memref<1x64xf32, #tpu.memory_space<vmem>>, %arg7: memref<32x32xf32, #tpu.memory_space<vmem>>, %arg8: memref<1x32xf32, #tpu.memory_space<vmem>>, %arg9: memref<16x32xf32, #tpu.memory_space<vmem>>) attributes {dimension_semantics = [#tpu.dimension_semantics<parallel>], iteration_bounds = array<i64: 1>, scalar_prefetch = 0 : i64, scratch_operands = 0 : i64, tpu.core_type = #tpu.core_type<tc>, window_params = [{transform_indices = @transform_0, window_bounds = array<i64: 16, 16>}, {transform_indices = @transform_1, window_bounds = array<i64: 20, 24>}, {pipeline_mode = #tpu.pipeline_mode<synchronous>, transform_indices = @transform_2, window_bounds = array<i64: 16, 32>}, {pipeline_mode = #tpu.pipeline_mode<synchronous>, transform_indices = @transform_3, window_bounds = array<i64: 1, 32>}, {pipeline_mode = #tpu.pipeline_mode<synchronous>, transform_indices = @transform_4, window_bounds = array<i64: 24, 64>}, {pipeline_mode = #tpu.pipeline_mode<synchronous>, transform_indices = @transform_5, window_bounds = array<i64: 1, 64>}, {pipeline_mode = #tpu.pipeline_mode<synchronous>, transform_indices = @transform_6, window_bounds = array<i64: 32, 32>}, {pipeline_mode = #tpu.pipeline_mode<synchronous>, transform_indices = @transform_7, window_bounds = array<i64: 1, 32>}, {transform_indices = @transform_8, window_bounds = array<i64: 16, 32>}]} {
    %c0 = arith.constant 0 : index
    %c0_0 = arith.constant 0 : index
    %0 = vector.load %arg1[%c0, %c0_0] : memref<16x16xf32, #tpu.memory_space<vmem>>, vector<16x16xf32>
    %c0_1 = arith.constant 0 : index
    %c0_2 = arith.constant 0 : index
    %1 = vector.load %arg2[%c0_1, %c0_2] : memref<20x24xf32, #tpu.memory_space<vmem>>, vector<20x24xf32>
    %c0_3 = arith.constant 0 : index
    %c0_4 = arith.constant 0 : index
    %2 = vector.load %arg3[%c0_3, %c0_4] : memref<16x32xf32, #tpu.memory_space<vmem>>, vector<16x32xf32>
    %cst = arith.constant dense<0.000000e+00> : vector<16x32xf32>
    %3 = tpu.matmul %0, %2, %cst {dimension_numbers = #tpu.dot_dimension_numbers<[1], [0], [0], [1], [0, 0, 1, 1], [], []>} : vector<16x16xf32>, vector<16x32xf32>, vector<16x32xf32> -> vector<16x32xf32>
    %c0_5 = arith.constant 0 : index
    %c0_6 = arith.constant 0 : index
    %4 = vector.load %arg4[%c0_5, %c0_6] : memref<1x32xf32, #tpu.memory_space<vmem>>, vector<1x32xf32>
    %5 = vector.broadcast %4 : vector<1x32xf32> to vector<16x32xf32>
    %6 = arith.addf %3, %5 : vector<16x32xf32>
    %c0_7 = arith.constant 0 : index
    %c0_8 = arith.constant 0 : index
    %7 = vector.load %arg5[%c0_7, %c0_8] : memref<24x64xf32, #tpu.memory_space<vmem>>, vector<24x64xf32>
    %cst_9 = arith.constant dense<0.000000e+00> : vector<20x64xf32>
    %8 = tpu.matmul %1, %7, %cst_9 {dimension_numbers = #tpu.dot_dimension_numbers<[1], [0], [0], [1], [0, 0, 1, 1], [], []>} : vector<20x24xf32>, vector<24x64xf32>, vector<20x64xf32> -> vector<20x64xf32>
    %c0_10 = arith.constant 0 : index
    %c0_11 = arith.constant 0 : index
    %9 = vector.load %arg6[%c0_10, %c0_11] : memref<1x64xf32, #tpu.memory_space<vmem>>, vector<1x64xf32>
    %10 = vector.broadcast %9 : vector<1x64xf32> to vector<20x64xf32>
    %11 = arith.addf %8, %10 : vector<20x64xf32>
    %12 = vector.extract_strided_slice %11 {offsets = [0, 0], sizes = [20, 32], strides = [1, 1]} : vector<20x64xf32> to vector<20x32xf32>
    %13 = vector.extract_strided_slice %11 {offsets = [0, 32], sizes = [20, 32], strides = [1, 1]} : vector<20x64xf32> to vector<20x32xf32>
    %14 = vector.shape_cast %6 : vector<16x32xf32> to vector<2x8x4x8xf32>
    %15 = tpu.transpose %14, [0, 2, 1, 3] : vector<2x8x4x8xf32> -> vector<2x4x8x8xf32>
    %16 = vector.shape_cast %15 : vector<2x4x8x8xf32> to vector<8x8x8xf32>
    %cst_12 = arith.constant 0.176776692 : f32
    %17 = vector.broadcast %cst_12 : f32 to vector<20x32xf32>
    %18 = arith.mulf %12, %17 : vector<20x32xf32>
    %19 = vector.shape_cast %18 : vector<20x32xf32> to vector<2x10x4x8xf32>
    %20 = tpu.transpose %19, [0, 2, 1, 3] : vector<2x10x4x8xf32> -> vector<2x4x10x8xf32>
    %21 = vector.shape_cast %20 : vector<2x4x10x8xf32> to vector<8x10x8xf32>
    %22 = vector.shape_cast %13 : vector<20x32xf32> to vector<2x10x4x8xf32>
    %23 = tpu.transpose %22, [0, 2, 1, 3] : vector<2x10x4x8xf32> -> vector<2x4x10x8xf32>
    %24 = vector.shape_cast %23 : vector<2x4x10x8xf32> to vector<8x10x8xf32>
    "tpu.trace_start"() <{level = 10 : i32, message = "bqd,bkd->bqk"}> : () -> ()
    %cst_13 = arith.constant dense<0.000000e+00> : vector<8x8x10xf32>
    %25 = tpu.matmul %16, %21, %cst_13 {dimension_numbers = #tpu.dot_dimension_numbers<[2], [2], [1], [1], [0, 0, 0, 1, 1, 1], [0], [0]>} : vector<8x8x8xf32>, vector<8x10x8xf32>, vector<8x8x10xf32> -> vector<8x8x10xf32>
    "tpu.trace_stop"() : () -> ()
    %cst_14 = arith.constant dense<0xFF800000> : vector<8x8xf32>
    %26 = vector.multi_reduction <maximumf>, %25, %cst_14 [2] : vector<8x8x10xf32> to vector<8x8xf32>
    %27 = vector.shape_cast %26 : vector<8x8xf32> to vector<8x8x1xf32>
    %28 = vector.broadcast %27 : vector<8x8x1xf32> to vector<8x8x10xf32>
    %29 = arith.subf %25, %28 : vector<8x8x10xf32>
    %30 = math.exp %29 : vector<8x8x10xf32>
    %cst_15 = arith.constant dense<0.000000e+00> : vector<8x8xf32>
    %31 = vector.multi_reduction <add>, %30, %cst_15 [2] : vector<8x8x10xf32> to vector<8x8xf32>
    %32 = vector.shape_cast %31 : vector<8x8xf32> to vector<8x8x1xf32>
    %33 = tpu.reciprocal %32 {approx = true} : vector<8x8x1xf32> -> vector<8x8x1xf32>
    %34 = vector.broadcast %33 : vector<8x8x1xf32> to vector<8x8x10xf32>
    %35 = arith.mulf %30, %34 : vector<8x8x10xf32>
    "tpu.trace_start"() <{level = 10 : i32, message = "bqk,bkd->bqd"}> : () -> ()
    %cst_16 = arith.constant dense<0.000000e+00> : vector<8x8x8xf32>
    %36 = tpu.matmul %35, %24, %cst_16 {dimension_numbers = #tpu.dot_dimension_numbers<[2], [1], [1], [2], [0, 0, 0, 1, 1, 2], [0], [0]>} : vector<8x8x10xf32>, vector<8x10x8xf32>, vector<8x8x8xf32> -> vector<8x8x8xf32>
    "tpu.trace_stop"() : () -> ()
    %37 = vector.shape_cast %36 : vector<8x8x8xf32> to vector<2x4x8x8xf32>
    %38 = tpu.transpose %37, [0, 2, 1, 3] : vector<2x4x8x8xf32> -> vector<2x8x4x8xf32>
    %39 = vector.shape_cast %38 : vector<2x8x4x8xf32> to vector<16x32xf32>
    %40 = arith.addf %6, %39 : vector<16x32xf32>
    %c0_17 = arith.constant 0 : index
    %c0_18 = arith.constant 0 : index
    %41 = vector.load %arg7[%c0_17, %c0_18] : memref<32x32xf32, #tpu.memory_space<vmem>>, vector<32x32xf32>
    %cst_19 = arith.constant dense<0.000000e+00> : vector<16x32xf32>
    %42 = tpu.matmul %40, %41, %cst_19 {dimension_numbers = #tpu.dot_dimension_numbers<[1], [0], [0], [1], [0, 0, 1, 1], [], []>} : vector<16x32xf32>, vector<32x32xf32>, vector<16x32xf32> -> vector<16x32xf32>
    %c0_20 = arith.constant 0 : index
    %c0_21 = arith.constant 0 : index
    %43 = vector.load %arg8[%c0_20, %c0_21] : memref<1x32xf32, #tpu.memory_space<vmem>>, vector<1x32xf32>
    %44 = vector.broadcast %43 : vector<1x32xf32> to vector<16x32xf32>
    %45 = arith.addf %42, %44 : vector<16x32xf32>
    %cst_22 = arith.constant 0.000000e+00 : f32
    %46 = vector.broadcast %cst_22 : f32 to vector<16x32xf32>
    %47 = arith.maximumf %45, %46 : vector<16x32xf32>
    %48 = arith.addf %40, %47 : vector<16x32xf32>
    %c0_23 = arith.constant 0 : index
    %c0_24 = arith.constant 0 : index
    %49 = vector.load %arg9[%c0_23, %c0_24] : memref<16x32xf32, #tpu.memory_space<vmem>>, vector<16x32xf32>
    tpu.vector_store %arg9[%c0_23, %c0_24], %48 {strides = array<i32>} : memref<16x32xf32, #tpu.memory_space<vmem>>, vector<16x32xf32>,
    return
  }
  func.func @transform_0(%arg0: i32) -> (i32, i32) {
    %c0_i32 = arith.constant 0 : i32
    %c0_i32_0 = arith.constant 0 : i32
    return %arg0, %c0_i32 : i32, i32
  }
  func.func @transform_1(%arg0: i32) -> (i32, i32) {
    %c0_i32 = arith.constant 0 : i32
    %c0_i32_0 = arith.constant 0 : i32
    return %arg0, %c0_i32 : i32, i32
  }
  func.func @transform_2(%arg0: i32) -> (i32, i32) {
    %c0_i32 = arith.constant 0 : i32
    %c0_i32_0 = arith.constant 0 : i32
    %c0_i32_1 = arith.constant 0 : i32
    return %c0_i32, %c0_i32_0 : i32, i32
  }
  func.func @transform_3(%arg0: i32) -> (i32, i32) {
    %c0_i32 = arith.constant 0 : i32
    %c0_i32_0 = arith.constant 0 : i32
    %c0_i32_1 = arith.constant 0 : i32
    return %c0_i32, %c0_i32_0 : i32, i32
  }
  func.func @transform_4(%arg0: i32) -> (i32, i32) {
    %c0_i32 = arith.constant 0 : i32
    %c0_i32_0 = arith.constant 0 : i32
    %c0_i32_1 = arith.constant 0 : i32
    return %c0_i32, %c0_i32_0 : i32, i32
  }
  func.func @transform_5(%arg0: i32) -> (i32, i32) {
    %c0_i32 = arith.constant 0 : i32
    %c0_i32_0 = arith.constant 0 : i32
    %c0_i32_1 = arith.constant 0 : i32
    return %c0_i32, %c0_i32_0 : i32, i32
  }
  func.func @transform_6(%arg0: i32) -> (i32, i32) {
    %c0_i32 = arith.constant 0 : i32
    %c0_i32_0 = arith.constant 0 : i32
    %c0_i32_1 = arith.constant 0 : i32
    return %c0_i32, %c0_i32_0 : i32, i32
  }
  func.func @transform_7(%arg0: i32) -> (i32, i32) {
    %c0_i32 = arith.constant 0 : i32
    %c0_i32_0 = arith.constant 0 : i32
    %c0_i32_1 = arith.constant 0 : i32
    return %c0_i32, %c0_i32_0 : i32, i32
  }
  func.func @transform_8(%arg0: i32) -> (i32, i32) {
    %c0_i32 = arith.constant 0 : i32
    %c0_i32_0 = arith.constant 0 : i32
    return %arg0, %c0_i32 : i32, i32
  }
}

</mosaic_0001>

<llo_original>
// kernel: tpu_custom_call.1
$region0: #{tpu_custom_call.1}
  #allocation0 [shape = 'u32[]', space=smem, size = 0x4, offset = 0x4, fixed_abs, tag = 'smem constant byte address 0x4 - core index']
  #allocation1 [shape = 'u32[144,128]{1,0:T(1,128)}', space=vmem, size = 0x12000, scoped, tag = 'internal scratch']
  %s0 = inlined_call_operand.hbm [shape: f32[16,16], index: 0, kind: input, shape index: {}]
  %s1 = inlined_call_operand.hbm [shape: f32[20,24], index: 1, kind: input, shape index: {}]
  %s2 = inlined_call_operand.hbm [shape: f32[16,32], index: 2, kind: input, shape index: {}]
  %s3 = inlined_call_operand.vmem [shape: f32[1,32], index: 3, kind: input, shape index: {}]
  %s4 = inlined_call_operand.hbm [shape: f32[24,64], index: 4, kind: input, shape index: {}]
  %s5 = inlined_call_operand.vmem [shape: f32[1,64], index: 5, kind: input, shape index: {}]
  %s6 = inlined_call_operand.hbm [shape: f32[32,32], index: 6, kind: input, shape index: {}]
  %s7 = inlined_call_operand.vmem [shape: f32[1,32], index: 7, kind: input, shape index: {}]
  %s8 = inlined_call_operand.hbm [shape: f32[16,32], index: 8, kind: output, shape index: {}]
  %s9 = sld [smem:[#allocation0]]
  $region62: #{tpu_custom_call.1} parent=0
    _
  %s11 = ssub.s32 1, %s9
  %s12 = scalar_select 0, %s11, %s9
  $region1: #{tpu_custom_call.1} parent=0
    #allocation2 [shape = 'u8[8192]{0}', space=vmem, size = 0x2000, scoped, tag = 'input window, operand 0, single buffered']
    #allocation3 [shape = 's32[1]{0}', space=sflag, size = 0x4, scoped, tag = 'scoped memory for tpu_custom_call.1']
    #allocation4 [shape = 's32[1]{0}', space=sflag, size = 0x4, scoped, tag = 'scoped memory for tpu_custom_call.1']
    #allocation5 [shape = 'u8[12288]{0}', space=vmem, size = 0x3000, scoped, tag = 'input window, operand 1, single buffered']
    #allocation6 [shape = 's32[1]{0}', space=sflag, size = 0x4, scoped, tag = 'scoped memory for tpu_custom_call.1']
    #allocation7 [shape = 'u8[8192]{0}', space=vmem, size = 0x2000, scoped, tag = 'input window, operand 2, single buffered']
    #allocation8 [shape = 'u8[12288]{0}', space=vmem, size = 0x3000, scoped, tag = 'input window, operand 4, single buffered']
    #allocation9 [shape = 's32[1]{0}', space=sflag, size = 0x4, scoped, tag = 'scoped memory for tpu_custom_call.1']
    #allocation10 [shape = 'u8[16384]{0}', space=vmem, size = 0x4000, scoped, tag = 'input window, operand 6, single buffered']
    #allocation11 [shape = 'u8[8192]{0}', space=vmem, size = 0x2000, scoped, tag = 'output window, operand 0, single buffered']
    %13 = vsyncpa [#allocation3], 0
    %14 = vsyncpa [#allocation6], 0
    %15 = vsyncpa [#allocation9], 0
    %16 = vsyncpa [#allocation4], 0
    // Predicated region
    $region2: #{tpu_custom_call.1} parent=1 // pred_check
      _
    $region3: #{tpu_custom_call.1} parent=1 // pred_check_branch
      %18 = sbr.rel (0) target = $region5
    $region4: #{tpu_custom_call.1} parent=1 // pred_region
      %s20 = ssub.s32 256, 256
      %21 = vsyncadd [#allocation3], %s20
      %s22 = sshll.u32 [#allocation2], 4
      %s23 = int_to_ptr.vmem [resolvable:$true] %s22
      %28 = dma.hbm_to_vmem [thread:$0]  %s0, 256, %s23, [#allocation3], 128, 128, 8
    $region5: #{tpu_custom_call.1} parent=1 // pred_fallthru
      _
    // Predicated region
    $region6: #{tpu_custom_call.1} parent=1 // pred_check
      _
    $region7: #{tpu_custom_call.1} parent=1 // pred_check_branch
      %30 = sbr.rel (0) target = $region9
    $region8: #{tpu_custom_call.1} parent=1 // pred_region
      %s32 = ssub.s32 384, 384
      %33 = vsyncadd [#allocation6], %s32
      %s34 = sshll.u32 [#allocation5], 4
      %s35 = int_to_ptr.vmem [resolvable:$true] %s34
      %40 = dma.hbm_to_vmem [thread:$0]  %s1, 384, %s35, [#allocation6], 128, 128, 8
    $region9: #{tpu_custom_call.1} parent=1 // pred_fallthru
      _
    // Predicated region
    $region10: #{tpu_custom_call.1} parent=1 // pred_check
      _
    $region11: #{tpu_custom_call.1} parent=1 // pred_check_branch
      %42 = sbr.rel (0) target = $region13
    $region12: #{tpu_custom_call.1} parent=1 // pred_region
      %s44 = ssub.s32 256, 256
      %45 = vsyncadd [#allocation6], %s44
      %s46 = sshll.u32 [#allocation7], 4
      %s47 = int_to_ptr.vmem [resolvable:$true] %s46
      %52 = dma.hbm_to_vmem [thread:$0]  %s2, 256, %s47, [#allocation6], 128, 128, 8
    $region13: #{tpu_custom_call.1} parent=1 // pred_fallthru
      _
    // Predicated region
    $region14: #{tpu_custom_call.1} parent=1 // pred_check
      _
    $region15: #{tpu_custom_call.1} parent=1 // pred_check_branch
      %54 = sbr.rel (0) target = $region17
    $region16: #{tpu_custom_call.1} parent=1 // pred_region
      _
    $region17: #{tpu_custom_call.1} parent=1 // pred_fallthru
      _
    // Predicated region
    $region18: #{tpu_custom_call.1} parent=1 // pred_check
      _
    $region19: #{tpu_custom_call.1} parent=1 // pred_check_branch
      %56 = sbr.rel (0) target = $region21
    $region20: #{tpu_custom_call.1} parent=1 // pred_region
      %s58 = ssub.s32 384, 384
      %59 = vsyncadd [#allocation9], %s58
      %s60 = sshll.u32 [#allocation8], 4
      %s61 = int_to_ptr.vmem [resolvable:$true] %s60
      %66 = dma.hbm_to_vmem [thread:$0]  %s4, 384, %s61, [#allocation9], 128, 128, 8
    $region21: #{tpu_custom_call.1} parent=1 // pred_fallthru
      _
    // Predicated region
    $region22: #{tpu_custom_call.1} parent=1 // pred_check
      _
    $region23: #{tpu_custom_call.1} parent=1 // pred_check_branch
      %68 = sbr.rel (0) target = $region25
    $region24: #{tpu_custom_call.1} parent=1 // pred_region
      _
    $region25: #{tpu_custom_call.1} parent=1 // pred_fallthru
      _
    // Predicated region
    $region26: #{tpu_custom_call.1} parent=1 // pred_check
      _
    $region27: #{tpu_custom_call.1} parent=1 // pred_check_branch
      %70 = sbr.rel (0) target = $region29
    $region28: #{tpu_custom_call.1} parent=1 // pred_region
      %s72 = ssub.s32 512, 512
      %73 = vsyncadd [#allocation9], %s72
      %s74 = sshll.u32 [#allocation10], 4
      %s75 = int_to_ptr.vmem [resolvable:$true] %s74
      %80 = dma.hbm_to_vmem [thread:$0]  %s6, 512, %s75, [#allocation9], 128, 128, 8
    $region29: #{tpu_custom_call.1} parent=1 // pred_fallthru
      _
    // Predicated region
    $region30: #{tpu_custom_call.1} parent=1 // pred_check
      _
    $region31: #{tpu_custom_call.1} parent=1 // pred_check_branch
      %82 = sbr.rel (0) target = $region33
    $region32: #{tpu_custom_call.1} parent=1 // pred_region
      _
    $region33: #{tpu_custom_call.1} parent=1 // pred_fallthru
      _
    // Predicated region
    $region34: #{tpu_custom_call.1} parent=1 // pred_check
      _
    $region35: #{tpu_custom_call.1} parent=1 // pred_check_branch
      %84 = sbr.rel (0) target = $region37
    $region36: #{tpu_custom_call.1} parent=1 // pred_region
      %85 = dma.done [#allocation3], 256
    $region37: #{tpu_custom_call.1} parent=1 // pred_fallthru
      _
    // Predicated region
    $region38: #{tpu_custom_call.1} parent=1 // pred_check
      _
    $region39: #{tpu_custom_call.1} parent=1 // pred_check_branch
      %87 = sbr.rel (0) target = $region41
    $region40: #{tpu_custom_call.1} parent=1 // pred_region
      %88 = dma.done [#allocation6], 384
    $region41: #{tpu_custom_call.1} parent=1 // pred_fallthru
      _
    // Predicated region
    $region42: #{tpu_custom_call.1} parent=1 // pred_check
      _
    $region43: #{tpu_custom_call.1} parent=1 // pred_check_branch
      %90 = sbr.rel (0) target = $region45
    $region44: #{tpu_custom_call.1} parent=1 // pred_region
      %91 = dma.done [#allocation6], 256
    $region45: #{tpu_custom_call.1} parent=1 // pred_fallthru
      _
    // Predicated region
    $region46: #{tpu_custom_call.1} parent=1 // pred_check
      _
    $region47: #{tpu_custom_call.1} parent=1 // pred_check_branch
      %93 = sbr.rel (0) target = $region49
    $region48: #{tpu_custom_call.1} parent=1 // pred_region
      %94 = dma.done [#allocation9], 384
    $region49: #{tpu_custom_call.1} parent=1 // pred_fallthru
      _
    // Predicated region
    $region50: #{tpu_custom_call.1} parent=1 // pred_check
      _
    $region51: #{tpu_custom_call.1} parent=1 // pred_check_branch
      %96 = sbr.rel (0) target = $region53
    $region52: #{tpu_custom_call.1} parent=1 // pred_region
      %97 = dma.done [#allocation9], 512
    $region53: #{tpu_custom_call.1} parent=1 // pred_fallthru
      _
    %v98 = vld [vmem:[#allocation2] sm:$0xff]
    %v99 = vld [vmem:[#allocation2 + $0x8] sm:$0xff]
    %v100 = vld [vmem:[#allocation5] sm:$0xff]
    %v101 = vld [vmem:[#allocation5 + $0x8] sm:$0xff]
    %v102 = vld [vmem:[#allocation5 + $0x10] sm:$0xf]
    %v103 = vld [vmem:[#allocation7] sm:$0xff]
    %v104 = vld [vmem:[#allocation7 + $0x8] sm:$0xff]
    %v105 = vld [vmem:[%s3] sm:$0x1]
    %v107 = vlaneseq
    %v108 = vshrl.u32 %v107, 7
    %v109 = vsub.s32 0, %v108
    %v110 = vrot.slane %v105, %v109
    %vm112 = vcmask 130048
    %v114 = vsel %vm112, %v98, 0
    %v117 = vsel %vm112, %v99, 0
    %119 = vmatprep.subr.mxu0 0.0
    %120 = vmatpush1.msra.mxu0 0.0
    %121 = vmatprep.subr.mxu0 0.0
    %122 = vmatpush1.msra.mxu0 0.0
    %123 = vmatprep.subr.mxu0 0.0
    %124 = vmatpush1.msra.mxu0 0.0
    %125 = vmatprep.subr.mxu0 0.0
    %126 = vmatpush1.msra.mxu0 0.0
    %127 = vmatprep.subr.mxu0 0.0
    %128 = vmatpush1.msra.mxu0 0.0
    %129 = vmatprep.subr.mxu0 0.0
    %130 = vmatpush1.msra.mxu0 0.0
    %131 = vmatprep.subr.mxu0 0.0
    %132 = vmatpush1.msra.mxu0 0.0
    %133 = vmatprep.subr.mxu0 0.0
    %134 = vmatpush1.msra.mxu0 0.0
    %135 = vmatprep.subr.mxu0 0.0
    %136 = vmatpush1.msra.mxu0 0.0
    %137 = vmatprep.subr.mxu0 0.0
    %138 = vmatpush1.msra.mxu0 0.0
    %139 = vmatprep.subr.mxu0 0.0
    %140 = vmatpush1.msra.mxu0 0.0
    %141 = vmatprep.subr.mxu0 0.0
    %142 = vmatpush1.msra.mxu0 0.0
    %143 = vmatprep.subr.mxu0 0.0
    %144 = vmatpush1.msra.mxu0 0.0
    %145 = vmatprep.subr.mxu0 0.0
    %146 = vmatpush1.msra.mxu0 0.0
    %147 = vmatprep.subr.mxu0 0.0
    %148 = vmatpush1.msra.mxu0 %v104
    %149 = vmatprep.subr.mxu0 0.0
    %150 = vmatpush1.msra.mxu0 %v103
    %151 = vmatprep.subr.mxu0 0.0
    %152 = vmatpush2.msra.mxu0 0.0
    %153 = vmatprep.subr.mxu0 0.0
    %154 = vmatpush2.msra.mxu0 0.0
    %155 = vmatprep.subr.mxu0 0.0
    %156 = vmatpush2.msra.mxu0 0.0
    %157 = vmatprep.subr.mxu0 0.0
    %158 = vmatpush2.msra.mxu0 0.0
    %159 = vmatprep.subr.mxu0 0.0
    %160 = vmatpush2.msra.mxu0 0.0
    %161 = vmatprep.subr.mxu0 0.0
    %162 = vmatpush2.msra.mxu0 0.0
    %163 = vmatprep.subr.mxu0 0.0
    %164 = vmatpush2.msra.mxu0 0.0
    %165 = vmatprep.subr.mxu0 0.0
    %166 = vmatpush2.msra.mxu0 0.0
    %167 = vmatprep.subr.mxu0 0.0
    %168 = vmatpush2.msra.mxu0 0.0
    %169 = vmatprep.subr.mxu0 0.0
    %170 = vmatpush2.msra.mxu0 0.0
    %171 = vmatprep.subr.mxu0 0.0
    %172 = vmatpush2.msra.mxu0 0.0
    %173 = vmatprep.subr.mxu0 0.0
    %174 = vmatpush2.msra.mxu0 0.0
    %175 = vmatprep.subr.mxu0 0.0
    %176 = vmatpush2.msra.mxu0 0.0
    %177 = vmatprep.subr.mxu0 0.0
    %178 = vmatpush2.msra.mxu0 0.0
    %179 = vmatprep.subr.mxu0 0.0
    %180 = vmatpush2.msra.mxu0 0.0
    %181 = vmatprep.subr.mxu0 0.0
    %182 = vmatpush2.msra.mxu0 0.0
    %183 = vmatprep.mubr.f32.mxu0 0.0
    %184 = vmatmul.mubr.f32.gmra.mxu0 %v114
    %v185 = vpop.f32.mrf.mxu0
    %v186 = vadd.f32 %v110, %v185
    %v187 = vpop.f32.mrf.mxu0
    %188 = vmatprep.mubr.f32.mxu0 0.0
    %189 = vmatmul.mubr.f32.gmra.mxu0 %v117
    %v190 = vpop.f32.mrf.mxu0
    %v191 = vadd.f32 %v110, %v190
    %v192 = vpop.f32.mrf.mxu0
    %193 = vdwg.mxu0
    %v194 = vld [vmem:[#allocation8] sm:$0xff]
    %v195 = vld [vmem:[#allocation8 + $0x8] sm:$0xff]
    %v196 = vld [vmem:[#allocation8 + $0x10] sm:$0xff]
    %v197 = vld [vmem:[%s5] sm:$0x1]
    %v199 = vlaneseq
    %v200 = vshrl.u32 %v199, 7
    %v201 = vsub.s32 0, %v200
    %v202 = vrot.slane %v197, %v201
    %vm204 = vcmask 195584
    %v206 = vsel %vm204, %v100, 0
    %v209 = vsel %vm204, %v101, 0
    %v212 = vsel %vm204, %v102, 0
    %214 = vmatprep.subr.mxu0 0.0
    %215 = vmatpush1.msra.mxu0 0.0
    %216 = vmatprep.subr.mxu0 0.0
    %217 = vmatpush1.msra.mxu0 0.0
    %218 = vmatprep.subr.mxu0 0.0
    %219 = vmatpush1.msra.mxu0 0.0
    %220 = vmatprep.subr.mxu0 0.0
    %221 = vmatpush1.msra.mxu0 0.0
    %222 = vmatprep.subr.mxu0 0.0
    %223 = vmatpush1.msra.mxu0 0.0
    %224 = vmatprep.subr.mxu0 0.0
    %225 = vmatpush1.msra.mxu0 0.0
    %226 = vmatprep.subr.mxu0 0.0
    %227 = vmatpush1.msra.mxu0 0.0
    %228 = vmatprep.subr.mxu0 0.0
    %229 = vmatpush1.msra.mxu0 0.0
    %230 = vmatprep.subr.mxu0 0.0
    %231 = vmatpush1.msra.mxu0 0.0
    %232 = vmatprep.subr.mxu0 0.0
    %233 = vmatpush1.msra.mxu0 0.0
    %234 = vmatprep.subr.mxu0 0.0
    %235 = vmatpush1.msra.mxu0 0.0
    %236 = vmatprep.subr.mxu0 0.0
    %237 = vmatpush1.msra.mxu0 0.0
    %238 = vmatprep.subr.mxu0 0.0
    %239 = vmatpush1.msra.mxu0 0.0
    %240 = vmatprep.subr.mxu0 0.0
    %241 = vmatpush1.msra.mxu0 %v196
    %242 = vmatprep.subr.mxu0 0.0
    %243 = vmatpush1.msra.mxu0 %v195
    %244 = vmatprep.subr.mxu0 0.0
    %245 = vmatpush1.msra.mxu0 %v194
    %246 = vmatprep.subr.mxu0 0.0
    %247 = vmatpush2.msra.mxu0 0.0
    %248 = vmatprep.subr.mxu0 0.0
    %249 = vmatpush2.msra.mxu0 0.0
    %250 = vmatprep.subr.mxu0 0.0
    %251 = vmatpush2.msra.mxu0 0.0
    %252 = vmatprep.subr.mxu0 0.0
    %253 = vmatpush2.msra.mxu0 0.0
    %254 = vmatprep.subr.mxu0 0.0
    %255 = vmatpush2.msra.mxu0 0.0
    %256 = vmatprep.subr.mxu0 0.0
    %257 = vmatpush2.msra.mxu0 0.0
    %258 = vmatprep.subr.mxu0 0.0
    %259 = vmatpush2.msra.mxu0 0.0
    %260 = vmatprep.subr.mxu0 0.0
    %261 = vmatpush2.msra.mxu0 0.0
    %262 = vmatprep.subr.mxu0 0.0
    %263 = vmatpush2.msra.mxu0 0.0
    %264 = vmatprep.subr.mxu0 0.0
    %265 = vmatpush2.msra.mxu0 0.0
    %266 = vmatprep.subr.mxu0 0.0
    %267 = vmatpush2.msra.mxu0 0.0
    %268 = vmatprep.subr.mxu0 0.0
    %269 = vmatpush2.msra.mxu0 0.0
    %270 = vmatprep.subr.mxu0 0.0
    %271 = vmatpush2.msra.mxu0 0.0
    %272 = vmatprep.subr.mxu0 0.0
    %273 = vmatpush2.msra.mxu0 0.0
    %274 = vmatprep.subr.mxu0 0.0
    %275 = vmatpush2.msra.mxu0 0.0
    %276 = vmatprep.subr.mxu0 0.0
    %277 = vmatpush2.msra.mxu0 0.0
    %278 = vmatprep.mubr.f32.mxu0 0.0
    %279 = vmatmul.mubr.f32.gmra.mxu0 %v206
    %v280 = vpop.f32.mrf.mxu0
    %v281 = vadd.f32 %v202, %v280
    %v282 = vpop.f32.mrf.mxu0
    %283 = vmatprep.mubr.f32.mxu0 0.0
    %284 = vmatmul.mubr.f32.gmra.mxu0 %v209
    %v285 = vpop.f32.mrf.mxu0
    %v286 = vadd.f32 %v202, %v285
    %v287 = vpop.f32.mrf.mxu0
    %288 = vmatprep.mubr.f32.mxu0 0.0
    %289 = vmatmul.mubr.f32.gmra.mxu0 %v212
    %v290 = vpop.f32.mrf.mxu0
    %v291 = vadd.f32 %v202, %v290
    %v292 = vpop.f32.mrf.mxu0
    %293 = vdwg.mxu0
    %296 = vrot.lane.b32.xlu0 %v186, 120
    %v297 = vpop.permute.xlu0 %296
    %298 = vrot.lane.b32.xlu0 %v191, 120
    %v299 = vpop.permute.xlu0 %298
    %302 = vrot.lane.b32.xlu0 %v186, 112
    %v303 = vpop.permute.xlu0 %302
    %304 = vrot.lane.b32.xlu0 %v191, 112
    %v305 = vpop.permute.xlu0 %304
    %308 = vrot.lane.b32.xlu0 %v186, 104
    %v309 = vpop.permute.xlu0 %308
    %310 = vrot.lane.b32.xlu0 %v191, 104
    %v311 = vpop.permute.xlu0 %310
    %v314 = vcombine.low %v186, %v303
    %v315 = vcombine.high %v186, %v303
    %v317 = vunpack.c.l.s4 1983009808
    %v318 = vunpack.c.0.s8 %v317
    %v319 = vlaneseq
    %v320 = vshrl.u32 %v319, 7
    %v321 = vsub.s32 %v318, %v320
    %v322 = vrot.slane %v314, %v321
    %v324 = vunpack.c.l.s4 1983009808
    %v325 = vunpack.c.0.s8 %v324
    %v326 = vlaneseq
    %v327 = vshrl.u32 %v326, 7
    %v328 = vsub.s32 %v325, %v327
    %v329 = vrot.slane %v315, %v328
    %v330 = vcombine.low %v297, %v309
    %v331 = vcombine.high %v297, %v309
    %v333 = vunpack.c.l.s4 1983009808
    %v334 = vunpack.c.0.s8 %v333
    %v335 = vlaneseq
    %v336 = vshrl.u32 %v335, 7
    %v337 = vsub.s32 %v334, %v336
    %v338 = vrot.slane %v330, %v337
    %v340 = vunpack.c.l.s4 1983009808
    %v341 = vunpack.c.0.s8 %v340
    %v342 = vlaneseq
    %v343 = vshrl.u32 %v342, 7
    %v344 = vsub.s32 %v341, %v343
    %v345 = vrot.slane %v331, %v344
    %v346 = vcombine.low %v322, %v338
    %v347 = vcombine.high %v322, %v338
    %v349 = vunpack.c.l.s4 1934713408
    %v350 = vunpack.c.0.s8 %v349
    %v351 = vlaneseq
    %v352 = vshrl.u32 %v351, 7
    %v353 = vsub.s32 %v350, %v352
    %v354 = vrot.slane %v346, %v353
    %v356 = vunpack.c.l.s4 1934713408
    %v357 = vunpack.c.0.s8 %v356
    %v358 = vlaneseq
    %v359 = vshrl.u32 %v358, 7
    %v360 = vsub.s32 %v357, %v359
    %v361 = vrot.slane %v347, %v360
    %v362 = vcombine.low %v329, %v345
    %v363 = vcombine.high %v329, %v345
    %v365 = vunpack.c.l.s4 1934713408
    %v366 = vunpack.c.0.s8 %v365
    %v367 = vlaneseq
    %v368 = vshrl.u32 %v367, 7
    %v369 = vsub.s32 %v366, %v368
    %v370 = vrot.slane %v362, %v369
    %v372 = vunpack.c.l.s4 1934713408
    %v373 = vunpack.c.0.s8 %v372
    %v374 = vlaneseq
    %v375 = vshrl.u32 %v374, 7
    %v376 = vsub.s32 %v373, %v375
    %v377 = vrot.slane %v363, %v376
    %v378 = vcombine.high %v354, 0.0
    %v379 = vcombine.high %v361, 0.0
    %v380 = vcombine.high %v370, 0.0
    %v381 = vcombine.high %v377, 0.0
    %v382 = vcombine.low %v191, %v305
    %v383 = vcombine.high %v191, %v305
    %v385 = vunpack.c.l.s4 1983009808
    %v386 = vunpack.c.0.s8 %v385
    %v387 = vlaneseq
    %v388 = vshrl.u32 %v387, 7
    %v389 = vsub.s32 %v386, %v388
    %v390 = vrot.slane %v382, %v389
    %v392 = vunpack.c.l.s4 1983009808
    %v393 = vunpack.c.0.s8 %v392
    %v394 = vlaneseq
    %v395 = vshrl.u32 %v394, 7
    %v396 = vsub.s32 %v393, %v395
    %v397 = vrot.slane %v383, %v396
    %v398 = vcombine.low %v299, %v311
    %v399 = vcombine.high %v299, %v311
    %v401 = vunpack.c.l.s4 1983009808
    %v402 = vunpack.c.0.s8 %v401
    %v403 = vlaneseq
    %v404 = vshrl.u32 %v403, 7
    %v405 = vsub.s32 %v402, %v404
    %v406 = vrot.slane %v398, %v405
    %v408 = vunpack.c.l.s4 1983009808
    %v409 = vunpack.c.0.s8 %v408
    %v410 = vlaneseq
    %v411 = vshrl.u32 %v410, 7
    %v412 = vsub.s32 %v409, %v411
    %v413 = vrot.slane %v399, %v412
    %v414 = vcombine.low %v390, %v406
    %v415 = vcombine.high %v390, %v406
    %v417 = vunpack.c.l.s4 1934713408
    %v418 = vunpack.c.0.s8 %v417
    %v419 = vlaneseq
    %v420 = vshrl.u32 %v419, 7
    %v421 = vsub.s32 %v418, %v420
    %v422 = vrot.slane %v414, %v421
    %v424 = vunpack.c.l.s4 1934713408
    %v425 = vunpack.c.0.s8 %v424
    %v426 = vlaneseq
    %v427 = vshrl.u32 %v426, 7
    %v428 = vsub.s32 %v425, %v427
    %v429 = vrot.slane %v415, %v428
    %v430 = vcombine.low %v397, %v413
    %v431 = vcombine.high %v397, %v413
    %v433 = vunpack.c.l.s4 1934713408
    %v434 = vunpack.c.0.s8 %v433
    %v435 = vlaneseq
    %v436 = vshrl.u32 %v435, 7
    %v437 = vsub.s32 %v434, %v436
    %v438 = vrot.slane %v430, %v437
    %v440 = vunpack.c.l.s4 1934713408
    %v441 = vunpack.c.0.s8 %v440
    %v442 = vlaneseq
    %v443 = vshrl.u32 %v442, 7
    %v444 = vsub.s32 %v441, %v443
    %v445 = vrot.slane %v431, %v444
    %v446 = vcombine.high %v422, 0.0
    %v447 = vcombine.high %v429, 0.0
    %v448 = vcombine.high %v438, 0.0
    %v449 = vcombine.high %v445, 0.0
    %v450 = vcombine.low %v354, %v361
    %v452 = vunpack.c.l.s4 1983009808
    %v453 = vunpack.c.0.s8 %v452
    %v454 = vlaneseq
    %v455 = vshrl.u32 %v454, 7
    %v456 = vsub.s32 %v453, %v455
    %v457 = vrot.slane %v450, %v456
    %v458 = vcombine.low %v378, %v379
    %v460 = vunpack.c.l.s4 1983009808
    %v461 = vunpack.c.0.s8 %v460
    %v462 = vlaneseq
    %v463 = vshrl.u32 %v462, 7
    %v464 = vsub.s32 %v461, %v463
    %v465 = vrot.slane %v458, %v464
    %v466 = vcombine.low %v370, %v377
    %v468 = vunpack.c.l.s4 1983009808
    %v469 = vunpack.c.0.s8 %v468
    %v470 = vlaneseq
    %v471 = vshrl.u32 %v470, 7
    %v472 = vsub.s32 %v469, %v471
    %v473 = vrot.slane %v466, %v472
    %v474 = vcombine.low %v380, %v381
    %v476 = vunpack.c.l.s4 1983009808
    %v477 = vunpack.c.0.s8 %v476
    %v478 = vlaneseq
    %v479 = vshrl.u32 %v478, 7
    %v480 = vsub.s32 %v477, %v479
    %v481 = vrot.slane %v474, %v480
    %v482 = vcombine.low %v457, %v465
    %v483 = vcombine.high %v457, %v465
    %v485 = vunpack.c.l.s4 1934713408
    %v486 = vunpack.c.0.s8 %v485
    %v487 = vlaneseq
    %v488 = vshrl.u32 %v487, 7
    %v489 = vsub.s32 %v486, %v488
    %v490 = vrot.slane %v482, %v489
    %v492 = vunpack.c.l.s4 1934713408
    %v493 = vunpack.c.0.s8 %v492
    %v494 = vlaneseq
    %v495 = vshrl.u32 %v494, 7
    %v496 = vsub.s32 %v493, %v495
    %v497 = vrot.slane %v483, %v496
    %v498 = vcombine.low %v473, %v481
    %v499 = vcombine.high %v473, %v481
    %v501 = vunpack.c.l.s4 1934713408
    %v502 = vunpack.c.0.s8 %v501
    %v503 = vlaneseq
    %v504 = vshrl.u32 %v503, 7
    %v505 = vsub.s32 %v502, %v504
    %v506 = vrot.slane %v498, %v505
    %v508 = vunpack.c.l.s4 1934713408
    %v509 = vunpack.c.0.s8 %v508
    %v510 = vlaneseq
    %v511 = vshrl.u32 %v510, 7
    %v512 = vsub.s32 %v509, %v511
    %v513 = vrot.slane %v499, %v512
    %v514 = vcombine.low %v490, %v506
    %v515 = vcombine.high %v490, %v506
    %v516 = vcombine.low %v497, %v513
    %v517 = vcombine.high %v497, %v513
    %v518 = vcombine.low %v422, %v429
    %v520 = vunpack.c.l.s4 1983009808
    %v521 = vunpack.c.0.s8 %v520
    %v522 = vlaneseq
    %v523 = vshrl.u32 %v522, 7
    %v524 = vsub.s32 %v521, %v523
    %v525 = vrot.slane %v518, %v524
    %v526 = vcombine.low %v446, %v447
    %v528 = vunpack.c.l.s4 1983009808
    %v529 = vunpack.c.0.s8 %v528
    %v530 = vlaneseq
    %v531 = vshrl.u32 %v530, 7
    %v532 = vsub.s32 %v529, %v531
    %v533 = vrot.slane %v526, %v532
    %v534 = vcombine.low %v438, %v445
    %v536 = vunpack.c.l.s4 1983009808
    %v537 = vunpack.c.0.s8 %v536
    %v538 = vlaneseq
    %v539 = vshrl.u32 %v538, 7
    %v540 = vsub.s32 %v537, %v539
    %v541 = vrot.slane %v534, %v540
    %v542 = vcombine.low %v448, %v449
    %v544 = vunpack.c.l.s4 1983009808
    %v545 = vunpack.c.0.s8 %v544
    %v546 = vlaneseq
    %v547 = vshrl.u32 %v546, 7
    %v548 = vsub.s32 %v545, %v547
    %v549 = vrot.slane %v542, %v548
    %v550 = vcombine.low %v525, %v533
    %v551 = vcombine.high %v525, %v533
    %v553 = vunpack.c.l.s4 1934713408
    %v554 = vunpack.c.0.s8 %v553
    %v555 = vlaneseq
    %v556 = vshrl.u32 %v555, 7
    %v557 = vsub.s32 %v554, %v556
    %v558 = vrot.slane %v550, %v557
    %v560 = vunpack.c.l.s4 1934713408
    %v561 = vunpack.c.0.s8 %v560
    %v562 = vlaneseq
    %v563 = vshrl.u32 %v562, 7
    %v564 = vsub.s32 %v561, %v563
    %v565 = vrot.slane %v551, %v564
    %v566 = vcombine.low %v541, %v549
    %v567 = vcombine.high %v541, %v549
    %v569 = vunpack.c.l.s4 1934713408
    %v570 = vunpack.c.0.s8 %v569
    %v571 = vlaneseq
    %v572 = vshrl.u32 %v571, 7
    %v573 = vsub.s32 %v570, %v572
    %v574 = vrot.slane %v566, %v573
    %v576 = vunpack.c.l.s4 1934713408
    %v577 = vunpack.c.0.s8 %v576
    %v578 = vlaneseq
    %v579 = vshrl.u32 %v578, 7
    %v580 = vsub.s32 %v577, %v579
    %v581 = vrot.slane %v567, %v580
    %v582 = vcombine.low %v558, %v574
    %v583 = vcombine.high %v558, %v574
    %v584 = vcombine.low %v565, %v581
    %v585 = vcombine.high %v565, %v581
    %v586 = vmul.f32 %v281, 0.17677669
    %v587 = vmul.f32 %v286, 0.17677669
    %v588 = vmul.f32 %v291, 0.17677669
    %592 = vrot.lane.b32.xlu0 %v586, 120
    %v593 = vpop.permute.xlu0 %592
    %594 = vrot.lane.b32.xlu0 %v587, 120
    %v595 = vpop.permute.xlu0 %594
    %596 = vrot.lane.b32.xlu0 %v588, 120
    %v597 = vpop.permute.xlu0 %596
    %601 = vrot.lane.b32.xlu0 %v586, 112
    %v602 = vpop.permute.xlu0 %601
    %603 = vrot.lane.b32.xlu0 %v587, 112
    %v604 = vpop.permute.xlu0 %603
    %605 = vrot.lane.b32.xlu0 %v588, 112
    %v606 = vpop.permute.xlu0 %605
    %610 = vrot.lane.b32.xlu0 %v586, 104
    %v611 = vpop.permute.xlu0 %610
    %612 = vrot.lane.b32.xlu0 %v587, 104
    %v613 = vpop.permute.xlu0 %612
    %614 = vrot.lane.b32.xlu0 %v588, 104
    %v615 = vpop.permute.xlu0 %614
    %v619 = vcombine.low %v586, %v602
    %v620 = vcombine.high %v586, %v602
    %v622 = vunpack.c.l.s4 1983009808
    %v623 = vunpack.c.0.s8 %v622
    %v624 = vlaneseq
    %v625 = vshrl.u32 %v624, 7
    %v626 = vsub.s32 %v623, %v625
    %v627 = vrot.slane %v619, %v626
    %v629 = vunpack.c.l.s4 1983009808
    %v630 = vunpack.c.0.s8 %v629
    %v631 = vlaneseq
    %v632 = vshrl.u32 %v631, 7
    %v633 = vsub.s32 %v630, %v632
    %v634 = vrot.slane %v620, %v633
    %v635 = vcombine.low %v593, %v611
    %v636 = vcombine.high %v593, %v611
    %v638 = vunpack.c.l.s4 1983009808
    %v639 = vunpack.c.0.s8 %v638
    %v640 = vlaneseq
    %v641 = vshrl.u32 %v640, 7
    %v642 = vsub.s32 %v639, %v641
    %v643 = vrot.slane %v635, %v642
    %v645 = vunpack.c.l.s4 1983009808
    %v646 = vunpack.c.0.s8 %v645
    %v647 = vlaneseq
    %v648 = vshrl.u32 %v647, 7
    %v649 = vsub.s32 %v646, %v648
    %v650 = vrot.slane %v636, %v649
    %v651 = vcombine.low %v627, %v643
    %v652 = vcombine.high %v627, %v643
    %v654 = vunpack.c.l.s4 1934713408
    %v655 = vunpack.c.0.s8 %v654
    %v656 = vlaneseq
    %v657 = vshrl.u32 %v656, 7
    %v658 = vsub.s32 %v655, %v657
    %v659 = vrot.slane %v651, %v658
    %v661 = vunpack.c.l.s4 1934713408
    %v662 = vunpack.c.0.s8 %v661
    %v663 = vlaneseq
    %v664 = vshrl.u32 %v663, 7
    %v665 = vsub.s32 %v662, %v664
    %v666 = vrot.slane %v652, %v665
    %v667 = vcombine.low %v634, %v650
    %v668 = vcombine.high %v634, %v650
    %v670 = vunpack.c.l.s4 1934713408
    %v671 = vunpack.c.0.s8 %v670
    %v672 = vlaneseq
    %v673 = vshrl.u32 %v672, 7
    %v674 = vsub.s32 %v671, %v673
    %v675 = vrot.slane %v667, %v674
    %v677 = vunpack.c.l.s4 1934713408
    %v678 = vunpack.c.0.s8 %v677
    %v679 = vlaneseq
    %v680 = vshrl.u32 %v679, 7
    %v681 = vsub.s32 %v678, %v680
    %v682 = vrot.slane %v668, %v681
    %v683 = vcombine.high %v659, 0.0
    %v684 = vcombine.high %v666, 0.0
    %v685 = vcombine.high %v675, 0.0
    %v686 = vcombine.high %v682, 0.0
    %v687 = vcombine.low %v587, %v604
    %v688 = vcombine.high %v587, %v604
    %v690 = vunpack.c.l.s4 1983009808
    %v691 = vunpack.c.0.s8 %v690
    %v692 = vlaneseq
    %v693 = vshrl.u32 %v692, 7
    %v694 = vsub.s32 %v691, %v693
    %v695 = vrot.slane %v687, %v694
    %v697 = vunpack.c.l.s4 1983009808
    %v698 = vunpack.c.0.s8 %v697
    %v699 = vlaneseq
    %v700 = vshrl.u32 %v699, 7
    %v701 = vsub.s32 %v698, %v700
    %v702 = vrot.slane %v688, %v701
    %v703 = vcombine.low %v595, %v613
    %v704 = vcombine.high %v595, %v613
    %v706 = vunpack.c.l.s4 1983009808
    %v707 = vunpack.c.0.s8 %v706
    %v708 = vlaneseq
    %v709 = vshrl.u32 %v708, 7
    %v710 = vsub.s32 %v707, %v709
    %v711 = vrot.slane %v703, %v710
    %v713 = vunpack.c.l.s4 1983009808
    %v714 = vunpack.c.0.s8 %v713
    %v715 = vlaneseq
    %v716 = vshrl.u32 %v715, 7
    %v717 = vsub.s32 %v714, %v716
    %v718 = vrot.slane %v704, %v717
    %v719 = vcombine.low %v695, %v711
    %v720 = vcombine.high %v695, %v711
    %v722 = vunpack.c.l.s4 1934713408
    %v723 = vunpack.c.0.s8 %v722
    %v724 = vlaneseq
    %v725 = vshrl.u32 %v724, 7
    %v726 = vsub.s32 %v723, %v725
    %v727 = vrot.slane %v719, %v726
    %v729 = vunpack.c.l.s4 1934713408
    %v730 = vunpack.c.0.s8 %v729
    %v731 = vlaneseq
    %v732 = vshrl.u32 %v731, 7
    %v733 = vsub.s32 %v730, %v732
    %v734 = vrot.slane %v720, %v733
    %v735 = vcombine.low %v702, %v718
    %v736 = vcombine.high %v702, %v718
    %v738 = vunpack.c.l.s4 1934713408
    %v739 = vunpack.c.0.s8 %v738
    %v740 = vlaneseq
    %v741 = vshrl.u32 %v740, 7
    %v742 = vsub.s32 %v739, %v741
    %v743 = vrot.slane %v735, %v742
    %v745 = vunpack.c.l.s4 1934713408
    %v746 = vunpack.c.0.s8 %v745
    %v747 = vlaneseq
    %v748 = vshrl.u32 %v747, 7
    %v749 = vsub.s32 %v746, %v748
    %v750 = vrot.slane %v736, %v749
    %v751 = vcombine.high %v734, 0.0
    %v752 = vcombine.high %v743, 0.0
    %v753 = vcombine.high %v750, 0.0
    %v754 = vcombine.low %v588, %v606
    %v756 = vunpack.c.l.s4 1983009808
    %v757 = vunpack.c.0.s8 %v756
    %v758 = vlaneseq
    %v759 = vshrl.u32 %v758, 7
    %v760 = vsub.s32 %v757, %v759
    %v761 = vrot.slane %v754, %v760
    %v762 = vcombine.low %v597, %v615
    %v764 = vunpack.c.l.s4 1983009808
    %v765 = vunpack.c.0.s8 %v764
    %v766 = vlaneseq
    %v767 = vshrl.u32 %v766, 7
    %v768 = vsub.s32 %v765, %v767
    %v769 = vrot.slane %v762, %v768
    %v770 = vcombine.low %v761, %v769
    %v771 = vcombine.high %v761, %v769
    %v773 = vunpack.c.l.s4 1934713408
    %v774 = vunpack.c.0.s8 %v773
    %v775 = vlaneseq
    %v776 = vshrl.u32 %v775, 7
    %v777 = vsub.s32 %v774, %v776
    %v778 = vrot.slane %v770, %v777
    %v780 = vunpack.c.l.s4 1934713408
    %v781 = vunpack.c.0.s8 %v780
    %v782 = vlaneseq
    %v783 = vshrl.u32 %v782, 7
    %v784 = vsub.s32 %v781, %v783
    %v785 = vrot.slane %v771, %v784
    %v786 = vcombine.high %v778, 0.0
    %v787 = vcombine.low %v659, %v666
    %v789 = vunpack.c.l.s4 1983009808
    %v790 = vunpack.c.0.s8 %v789
    %v791 = vlaneseq
    %v792 = vshrl.u32 %v791, 7
    %v793 = vsub.s32 %v790, %v792
    %v794 = vrot.slane %v787, %v793
    %v795 = vcombine.low %v683, %v684
    %v797 = vunpack.c.l.s4 1983009808
    %v798 = vunpack.c.0.s8 %v797
    %v799 = vlaneseq
    %v800 = vshrl.u32 %v799, 7
    %v801 = vsub.s32 %v798, %v800
    %v802 = vrot.slane %v795, %v801
    %v803 = vcombine.low %v675, %v682
    %v805 = vunpack.c.l.s4 1983009808
    %v806 = vunpack.c.0.s8 %v805
    %v807 = vlaneseq
    %v808 = vshrl.u32 %v807, 7
    %v809 = vsub.s32 %v806, %v808
    %v810 = vrot.slane %v803, %v809
    %v811 = vcombine.low %v685, %v686
    %v813 = vunpack.c.l.s4 1983009808
    %v814 = vunpack.c.0.s8 %v813
    %v815 = vlaneseq
    %v816 = vshrl.u32 %v815, 7
    %v817 = vsub.s32 %v814, %v816
    %v818 = vrot.slane %v811, %v817
    %v819 = vcombine.low %v794, %v802
    %v820 = vcombine.high %v794, %v802
    %v822 = vunpack.c.l.s4 1934713408
    %v823 = vunpack.c.0.s8 %v822
    %v824 = vlaneseq
    %v825 = vshrl.u32 %v824, 7
    %v826 = vsub.s32 %v823, %v825
    %v827 = vrot.slane %v819, %v826
    %v829 = vunpack.c.l.s4 1934713408
    %v830 = vunpack.c.0.s8 %v829
    %v831 = vlaneseq
    %v832 = vshrl.u32 %v831, 7
    %v833 = vsub.s32 %v830, %v832
    %v834 = vrot.slane %v820, %v833
    %v835 = vcombine.low %v810, %v818
    %v836 = vcombine.high %v810, %v818
    %v838 = vunpack.c.l.s4 1934713408
    %v839 = vunpack.c.0.s8 %v838
    %v840 = vlaneseq
    %v841 = vshrl.u32 %v840, 7
    %v842 = vsub.s32 %v839, %v841
    %v843 = vrot.slane %v835, %v842
    %v845 = vunpack.c.l.s4 1934713408
    %v846 = vunpack.c.0.s8 %v845
    %v847 = vlaneseq
    %v848 = vshrl.u32 %v847, 7
    %v849 = vsub.s32 %v846, %v848
    %v850 = vrot.slane %v836, %v849
    %v851 = vcombine.low %v827, %v843
    %v852 = vcombine.high %v827, %v843
    %v853 = vcombine.low %v834, %v850
    %v854 = vcombine.high %v834, %v850
    %v856 = vunpack.c.l.s4 1983009808
    %v857 = vunpack.c.0.s8 %v856
    %v858 = vlaneseq
    %v859 = vshrl.u32 %v858, 7
    %v860 = vsub.s32 %v857, %v859
    %v861 = vrot.slane %v727, %v860
    %v862 = vcombine.high %v727, 0.0
    %v864 = vunpack.c.l.s4 1983009808
    %v865 = vunpack.c.0.s8 %v864
    %v866 = vlaneseq
    %v867 = vshrl.u32 %v866, 7
    %v868 = vsub.s32 %v865, %v867
    %v869 = vrot.slane %v862, %v868
    %v870 = vcombine.low %v861, %v869
    %v871 = vcombine.high %v861, %v869
    %v873 = vunpack.c.l.s4 1934713408
    %v874 = vunpack.c.0.s8 %v873
    %v875 = vlaneseq
    %v876 = vshrl.u32 %v875, 7
    %v877 = vsub.s32 %v874, %v876
    %v878 = vrot.slane %v870, %v877
    %v880 = vunpack.c.l.s4 1934713408
    %v881 = vunpack.c.0.s8 %v880
    %v882 = vlaneseq
    %v883 = vshrl.u32 %v882, 7
    %v884 = vsub.s32 %v881, %v883
    %v885 = vrot.slane %v871, %v884
    %v886 = vcombine.high %v878, 0.0
    %v887 = vcombine.high %v885, 0.0
    %v888 = vcombine.low %v734, %v743
    %v890 = vunpack.c.l.s4 1983009808
    %v891 = vunpack.c.0.s8 %v890
    %v892 = vlaneseq
    %v893 = vshrl.u32 %v892, 7
    %v894 = vsub.s32 %v891, %v893
    %v895 = vrot.slane %v888, %v894
    %v896 = vcombine.low %v751, %v752
    %v898 = vunpack.c.l.s4 1983009808
    %v899 = vunpack.c.0.s8 %v898
    %v900 = vlaneseq
    %v901 = vshrl.u32 %v900, 7
    %v902 = vsub.s32 %v899, %v901
    %v903 = vrot.slane %v896, %v902
    %v904 = vcombine.low %v750, %v778
    %v906 = vunpack.c.l.s4 1983009808
    %v907 = vunpack.c.0.s8 %v906
    %v908 = vlaneseq
    %v909 = vshrl.u32 %v908, 7
    %v910 = vsub.s32 %v907, %v909
    %v911 = vrot.slane %v904, %v910
    %v912 = vcombine.low %v753, %v786
    %v914 = vunpack.c.l.s4 1983009808
    %v915 = vunpack.c.0.s8 %v914
    %v916 = vlaneseq
    %v917 = vshrl.u32 %v916, 7
    %v918 = vsub.s32 %v915, %v917
    %v919 = vrot.slane %v912, %v918
    %v920 = vcombine.low %v895, %v903
    %v921 = vcombine.high %v895, %v903
    %v923 = vunpack.c.l.s4 1934713408
    %v924 = vunpack.c.0.s8 %v923
    %v925 = vlaneseq
    %v926 = vshrl.u32 %v925, 7
    %v927 = vsub.s32 %v924, %v926
    %v928 = vrot.slane %v920, %v927
    %v930 = vunpack.c.l.s4 1934713408
    %v931 = vunpack.c.0.s8 %v930
    %v932 = vlaneseq
    %v933 = vshrl.u32 %v932, 7
    %v934 = vsub.s32 %v931, %v933
    %v935 = vrot.slane %v921, %v934
    %v936 = vcombine.low %v911, %v919
    %v937 = vcombine.high %v911, %v919
    %v939 = vunpack.c.l.s4 1934713408
    %v940 = vunpack.c.0.s8 %v939
    %v941 = vlaneseq
    %v942 = vshrl.u32 %v941, 7
    %v943 = vsub.s32 %v940, %v942
    %v944 = vrot.slane %v936, %v943
    %v946 = vunpack.c.l.s4 1934713408
    %v947 = vunpack.c.0.s8 %v946
    %v948 = vlaneseq
    %v949 = vshrl.u32 %v948, 7
    %v950 = vsub.s32 %v947, %v949
    %v951 = vrot.slane %v937, %v950
    %v952 = vcombine.low %v928, %v944
    %v953 = vcombine.high %v928, %v944
    %v954 = vcombine.low %v935, %v951
    %v955 = vcombine.high %v935, %v951
    %v957 = vunpack.c.l.s4 1983009808
    %v958 = vunpack.c.0.s8 %v957
    %v959 = vlaneseq
    %v960 = vshrl.u32 %v959, 7
    %v961 = vsub.s32 %v958, %v960
    %v962 = vrot.slane %v785, %v961
    %v963 = vcombine.high %v785, 0.0
    %v965 = vunpack.c.l.s4 1983009808
    %v966 = vunpack.c.0.s8 %v965
    %v967 = vlaneseq
    %v968 = vshrl.u32 %v967, 7
    %v969 = vsub.s32 %v966, %v968
    %v970 = vrot.slane %v963, %v969
    %v971 = vcombine.low %v962, %v970
    %v972 = vcombine.high %v962, %v970
    %v974 = vunpack.c.l.s4 1934713408
    %v975 = vunpack.c.0.s8 %v974
    %v976 = vlaneseq
    %v977 = vshrl.u32 %v976, 7
    %v978 = vsub.s32 %v975, %v977
    %v979 = vrot.slane %v971, %v978
    %v981 = vunpack.c.l.s4 1934713408
    %v982 = vunpack.c.0.s8 %v981
    %v983 = vlaneseq
    %v984 = vshrl.u32 %v983, 7
    %v985 = vsub.s32 %v982, %v984
    %v986 = vrot.slane %v972, %v985
    %v987 = vcombine.high %v979, 0.0
    %v988 = vcombine.high %v986, 0.0
    %992 = vrot.lane.b32.xlu0 %v281, 120
    %v993 = vpop.permute.xlu0 %992
    %994 = vrot.lane.b32.xlu0 %v286, 120
    %v995 = vpop.permute.xlu0 %994
    %996 = vrot.lane.b32.xlu0 %v291, 120
    %v997 = vpop.permute.xlu0 %996
    %998 = vrot.lane.b32.xlu0 %v281, 112
    %v999 = vpop.permute.xlu0 %998
    %1000 = vrot.lane.b32.xlu0 %v286, 112
    %v1001 = vpop.permute.xlu0 %1000
    %1002 = vrot.lane.b32.xlu0 %v291, 112
    %v1003 = vpop.permute.xlu0 %1002
    %1004 = vrot.lane.b32.xlu0 %v281, 104
    %v1005 = vpop.permute.xlu0 %1004
    %1006 = vrot.lane.b32.xlu0 %v286, 104
    %v1007 = vpop.permute.xlu0 %1006
    %1008 = vrot.lane.b32.xlu0 %v291, 104
    %v1009 = vpop.permute.xlu0 %1008
    %1010 = vrot.lane.b32.xlu0 %v281, 96
    %v1011 = vpop.permute.xlu0 %1010
    %1012 = vrot.lane.b32.xlu0 %v286, 96
    %v1013 = vpop.permute.xlu0 %1012
    %1014 = vrot.lane.b32.xlu0 %v291, 96
    %v1015 = vpop.permute.xlu0 %1014
    %1016 = vrot.lane.b32.xlu0 %v993, 96
    %v1017 = vpop.permute.xlu0 %1016
    %1018 = vrot.lane.b32.xlu0 %v995, 96
    %v1019 = vpop.permute.xlu0 %1018
    %1020 = vrot.lane.b32.xlu0 %v997, 96
    %v1021 = vpop.permute.xlu0 %1020
    %1022 = vrot.lane.b32.xlu0 %v999, 96
    %v1023 = vpop.permute.xlu0 %1022
    %1024 = vrot.lane.b32.xlu0 %v1001, 96
    %v1025 = vpop.permute.xlu0 %1024
    %1026 = vrot.lane.b32.xlu0 %v1003, 96
    %v1027 = vpop.permute.xlu0 %1026
    %1028 = vrot.lane.b32.xlu0 %v1005, 96
    %v1029 = vpop.permute.xlu0 %1028
    %1030 = vrot.lane.b32.xlu0 %v1007, 96
    %v1031 = vpop.permute.xlu0 %1030
    %1032 = vrot.lane.b32.xlu0 %v1009, 96
    %v1033 = vpop.permute.xlu0 %1032
    %v1046 = vcombine.low %v1011, %v1023
    %v1047 = vcombine.high %v1011, %v1023
    %v1049 = vunpack.c.l.s4 1983009808
    %v1050 = vunpack.c.0.s8 %v1049
    %v1051 = vlaneseq
    %v1052 = vshrl.u32 %v1051, 7
    %v1053 = vsub.s32 %v1050, %v1052
    %v1054 = vrot.slane %v1046, %v1053
    %v1056 = vunpack.c.l.s4 1983009808
    %v1057 = vunpack.c.0.s8 %v1056
    %v1058 = vlaneseq
    %v1059 = vshrl.u32 %v1058, 7
    %v1060 = vsub.s32 %v1057, %v1059
    %v1061 = vrot.slane %v1047, %v1060
    %v1062 = vcombine.low %v1017, %v1029
    %v1063 = vcombine.high %v1017, %v1029
    %v1065 = vunpack.c.l.s4 1983009808
    %v1066 = vunpack.c.0.s8 %v1065
    %v1067 = vlaneseq
    %v1068 = vshrl.u32 %v1067, 7
    %v1069 = vsub.s32 %v1066, %v1068
    %v1070 = vrot.slane %v1062, %v1069
    %v1072 = vunpack.c.l.s4 1983009808
    %v1073 = vunpack.c.0.s8 %v1072
    %v1074 = vlaneseq
    %v1075 = vshrl.u32 %v1074, 7
    %v1076 = vsub.s32 %v1073, %v1075
    %v1077 = vrot.slane %v1063, %v1076
    %v1078 = vcombine.low %v1054, %v1070
    %v1079 = vcombine.high %v1054, %v1070
    %v1081 = vunpack.c.l.s4 1934713408
    %v1082 = vunpack.c.0.s8 %v1081
    %v1083 = vlaneseq
    %v1084 = vshrl.u32 %v1083, 7
    %v1085 = vsub.s32 %v1082, %v1084
    %v1086 = vrot.slane %v1078, %v1085
    %v1088 = vunpack.c.l.s4 1934713408
    %v1089 = vunpack.c.0.s8 %v1088
    %v1090 = vlaneseq
    %v1091 = vshrl.u32 %v1090, 7
    %v1092 = vsub.s32 %v1089, %v1091
    %v1093 = vrot.slane %v1079, %v1092
    %v1094 = vcombine.low %v1061, %v1077
    %v1095 = vcombine.high %v1061, %v1077
    %v1097 = vunpack.c.l.s4 1934713408
    %v1098 = vunpack.c.0.s8 %v1097
    %v1099 = vlaneseq
    %v1100 = vshrl.u32 %v1099, 7
    %v1101 = vsub.s32 %v1098, %v1100
    %v1102 = vrot.slane %v1094, %v1101
    %v1104 = vunpack.c.l.s4 1934713408
    %v1105 = vunpack.c.0.s8 %v1104
    %v1106 = vlaneseq
    %v1107 = vshrl.u32 %v1106, 7
    %v1108 = vsub.s32 %v1105, %v1107
    %v1109 = vrot.slane %v1095, %v1108
    %v1110 = vcombine.high %v1086, 0.0
    %v1111 = vcombine.high %v1093, 0.0
    %v1112 = vcombine.high %v1102, 0.0
    %v1113 = vcombine.high %v1109, 0.0
    %v1114 = vcombine.low %v1013, %v1025
    %v1115 = vcombine.high %v1013, %v1025
    %v1117 = vunpack.c.l.s4 1983009808
    %v1118 = vunpack.c.0.s8 %v1117
    %v1119 = vlaneseq
    %v1120 = vshrl.u32 %v1119, 7
    %v1121 = vsub.s32 %v1118, %v1120
    %v1122 = vrot.slane %v1114, %v1121
    %v1124 = vunpack.c.l.s4 1983009808
    %v1125 = vunpack.c.0.s8 %v1124
    %v1126 = vlaneseq
    %v1127 = vshrl.u32 %v1126, 7
    %v1128 = vsub.s32 %v1125, %v1127
    %v1129 = vrot.slane %v1115, %v1128
    %v1130 = vcombine.low %v1019, %v1031
    %v1131 = vcombine.high %v1019, %v1031
    %v1133 = vunpack.c.l.s4 1983009808
    %v1134 = vunpack.c.0.s8 %v1133
    %v1135 = vlaneseq
    %v1136 = vshrl.u32 %v1135, 7
    %v1137 = vsub.s32 %v1134, %v1136
    %v1138 = vrot.slane %v1130, %v1137
    %v1140 = vunpack.c.l.s4 1983009808
    %v1141 = vunpack.c.0.s8 %v1140
    %v1142 = vlaneseq
    %v1143 = vshrl.u32 %v1142, 7
    %v1144 = vsub.s32 %v1141, %v1143
    %v1145 = vrot.slane %v1131, %v1144
    %v1146 = vcombine.low %v1122, %v1138
    %v1147 = vcombine.high %v1122, %v1138
    %v1149 = vunpack.c.l.s4 1934713408
    %v1150 = vunpack.c.0.s8 %v1149
    %v1151 = vlaneseq
    %v1152 = vshrl.u32 %v1151, 7
    %v1153 = vsub.s32 %v1150, %v1152
    %v1154 = vrot.slane %v1146, %v1153
    %v1156 = vunpack.c.l.s4 1934713408
    %v1157 = vunpack.c.0.s8 %v1156
    %v1158 = vlaneseq
    %v1159 = vshrl.u32 %v1158, 7
    %v1160 = vsub.s32 %v1157, %v1159
    %v1161 = vrot.slane %v1147, %v1160
    %v1162 = vcombine.low %v1129, %v1145
    %v1163 = vcombine.high %v1129, %v1145
    %v1165 = vunpack.c.l.s4 1934713408
    %v1166 = vunpack.c.0.s8 %v1165
    %v1167 = vlaneseq
    %v1168 = vshrl.u32 %v1167, 7
    %v1169 = vsub.s32 %v1166, %v1168
    %v1170 = vrot.slane %v1162, %v1169
    %v1172 = vunpack.c.l.s4 1934713408
    %v1173 = vunpack.c.0.s8 %v1172
    %v1174 = vlaneseq
    %v1175 = vshrl.u32 %v1174, 7
    %v1176 = vsub.s32 %v1173, %v1175
    %v1177 = vrot.slane %v1163, %v1176
    %v1178 = vcombine.high %v1161, 0.0
    %v1179 = vcombine.high %v1170, 0.0
    %v1180 = vcombine.high %v1177, 0.0
    %v1181 = vcombine.low %v1015, %v1027
    %v1183 = vunpack.c.l.s4 1983009808
    %v1184 = vunpack.c.0.s8 %v1183
    %v1185 = vlaneseq
    %v1186 = vshrl.u32 %v1185, 7
    %v1187 = vsub.s32 %v1184, %v1186
    %v1188 = vrot.slane %v1181, %v1187
    %v1189 = vcombine.low %v1021, %v1033
    %v1191 = vunpack.c.l.s4 1983009808
    %v1192 = vunpack.c.0.s8 %v1191
    %v1193 = vlaneseq
    %v1194 = vshrl.u32 %v1193, 7
    %v1195 = vsub.s32 %v1192, %v1194
    %v1196 = vrot.slane %v1189, %v1195
    %v1197 = vcombine.low %v1188, %v1196
    %v1198 = vcombine.high %v1188, %v1196
    %v1200 = vunpack.c.l.s4 1934713408
    %v1201 = vunpack.c.0.s8 %v1200
    %v1202 = vlaneseq
    %v1203 = vshrl.u32 %v1202, 7
    %v1204 = vsub.s32 %v1201, %v1203
    %v1205 = vrot.slane %v1197, %v1204
    %v1207 = vunpack.c.l.s4 1934713408
    %v1208 = vunpack.c.0.s8 %v1207
    %v1209 = vlaneseq
    %v1210 = vshrl.u32 %v1209, 7
    %v1211 = vsub.s32 %v1208, %v1210
    %v1212 = vrot.slane %v1198, %v1211
    %v1213 = vcombine.high %v1205, 0.0
    %v1214 = vcombine.low %v1086, %v1093
    %v1216 = vunpack.c.l.s4 1983009808
    %v1217 = vunpack.c.0.s8 %v1216
    %v1218 = vlaneseq
    %v1219 = vshrl.u32 %v1218, 7
    %v1220 = vsub.s32 %v1217, %v1219
    %v1221 = vrot.slane %v1214, %v1220
    %v1222 = vcombine.low %v1110, %v1111
    %v1224 = vunpack.c.l.s4 1983009808
    %v1225 = vunpack.c.0.s8 %v1224
    %v1226 = vlaneseq
    %v1227 = vshrl.u32 %v1226, 7
    %v1228 = vsub.s32 %v1225, %v1227
    %v1229 = vrot.slane %v1222, %v1228
    %v1230 = vcombine.low %v1102, %v1109
    %v1232 = vunpack.c.l.s4 1983009808
    %v1233 = vunpack.c.0.s8 %v1232
    %v1234 = vlaneseq
    %v1235 = vshrl.u32 %v1234, 7
    %v1236 = vsub.s32 %v1233, %v1235
    %v1237 = vrot.slane %v1230, %v1236
    %v1238 = vcombine.low %v1112, %v1113
    %v1240 = vunpack.c.l.s4 1983009808
    %v1241 = vunpack.c.0.s8 %v1240
    %v1242 = vlaneseq
    %v1243 = vshrl.u32 %v1242, 7
    %v1244 = vsub.s32 %v1241, %v1243
    %v1245 = vrot.slane %v1238, %v1244
    %v1246 = vcombine.low %v1221, %v1229
    %v1247 = vcombine.high %v1221, %v1229
    %v1249 = vunpack.c.l.s4 1934713408
    %v1250 = vunpack.c.0.s8 %v1249
    %v1251 = vlaneseq
    %v1252 = vshrl.u32 %v1251, 7
    %v1253 = vsub.s32 %v1250, %v1252
    %v1254 = vrot.slane %v1246, %v1253
    %v1256 = vunpack.c.l.s4 1934713408
    %v1257 = vunpack.c.0.s8 %v1256
    %v1258 = vlaneseq
    %v1259 = vshrl.u32 %v1258, 7
    %v1260 = vsub.s32 %v1257, %v1259
    %v1261 = vrot.slane %v1247, %v1260
    %v1262 = vcombine.low %v1237, %v1245
    %v1263 = vcombine.high %v1237, %v1245
    %v1265 = vunpack.c.l.s4 1934713408
    %v1266 = vunpack.c.0.s8 %v1265
    %v1267 = vlaneseq
    %v1268 = vshrl.u32 %v1267, 7
    %v1269 = vsub.s32 %v1266, %v1268
    %v1270 = vrot.slane %v1262, %v1269
    %v1272 = vunpack.c.l.s4 1934713408
    %v1273 = vunpack.c.0.s8 %v1272
    %v1274 = vlaneseq
    %v1275 = vshrl.u32 %v1274, 7
    %v1276 = vsub.s32 %v1273, %v1275
    %v1277 = vrot.slane %v1263, %v1276
    %v1278 = vcombine.low %v1254, %v1270
    %v1279 = vcombine.high %v1254, %v1270
    %v1280 = vcombine.low %v1261, %v1277
    %v1281 = vcombine.high %v1261, %v1277
    %v1283 = vunpack.c.l.s4 1983009808
    %v1284 = vunpack.c.0.s8 %v1283
    %v1285 = vlaneseq
    %v1286 = vshrl.u32 %v1285, 7
    %v1287 = vsub.s32 %v1284, %v1286
    %v1288 = vrot.slane %v1154, %v1287
    %v1289 = vcombine.high %v1154, 0.0
    %v1291 = vunpack.c.l.s4 1983009808
    %v1292 = vunpack.c.0.s8 %v1291
    %v1293 = vlaneseq
    %v1294 = vshrl.u32 %v1293, 7
    %v1295 = vsub.s32 %v1292, %v1294
    %v1296 = vrot.slane %v1289, %v1295
    %v1297 = vcombine.low %v1288, %v1296
    %v1298 = vcombine.high %v1288, %v1296
    %v1300 = vunpack.c.l.s4 1934713408
    %v1301 = vunpack.c.0.s8 %v1300
    %v1302 = vlaneseq
    %v1303 = vshrl.u32 %v1302, 7
    %v1304 = vsub.s32 %v1301, %v1303
    %v1305 = vrot.slane %v1297, %v1304
    %v1307 = vunpack.c.l.s4 1934713408
    %v1308 = vunpack.c.0.s8 %v1307
    %v1309 = vlaneseq
    %v1310 = vshrl.u32 %v1309, 7
    %v1311 = vsub.s32 %v1308, %v1310
    %v1312 = vrot.slane %v1298, %v1311
    %v1313 = vcombine.high %v1305, 0.0
    %v1314 = vcombine.high %v1312, 0.0
    %v1315 = vcombine.low %v1161, %v1170
    %v1317 = vunpack.c.l.s4 1983009808
    %v1318 = vunpack.c.0.s8 %v1317
    %v1319 = vlaneseq
    %v1320 = vshrl.u32 %v1319, 7
    %v1321 = vsub.s32 %v1318, %v1320
    %v1322 = vrot.slane %v1315, %v1321
    %v1323 = vcombine.low %v1178, %v1179
    %v1325 = vunpack.c.l.s4 1983009808
    %v1326 = vunpack.c.0.s8 %v1325
    %v1327 = vlaneseq
    %v1328 = vshrl.u32 %v1327, 7
    %v1329 = vsub.s32 %v1326, %v1328
    %v1330 = vrot.slane %v1323, %v1329
    %v1331 = vcombine.low %v1177, %v1205
    %v1333 = vunpack.c.l.s4 1983009808
    %v1334 = vunpack.c.0.s8 %v1333
    %v1335 = vlaneseq
    %v1336 = vshrl.u32 %v1335, 7
    %v1337 = vsub.s32 %v1334, %v1336
    %v1338 = vrot.slane %v1331, %v1337
    %v1339 = vcombine.low %v1180, %v1213
    %v1341 = vunpack.c.l.s4 1983009808
    %v1342 = vunpack.c.0.s8 %v1341
    %v1343 = vlaneseq
    %v1344 = vshrl.u32 %v1343, 7
    %v1345 = vsub.s32 %v1342, %v1344
    %v1346 = vrot.slane %v1339, %v1345
    %v1347 = vcombine.low %v1322, %v1330
    %v1348 = vcombine.high %v1322, %v1330
    %v1350 = vunpack.c.l.s4 1934713408
    %v1351 = vunpack.c.0.s8 %v1350
    %v1352 = vlaneseq
    %v1353 = vshrl.u32 %v1352, 7
    %v1354 = vsub.s32 %v1351, %v1353
    %v1355 = vrot.slane %v1347, %v1354
    %v1357 = vunpack.c.l.s4 1934713408
    %v1358 = vunpack.c.0.s8 %v1357
    %v1359 = vlaneseq
    %v1360 = vshrl.u32 %v1359, 7
    %v1361 = vsub.s32 %v1358, %v1360
    %v1362 = vrot.slane %v1348, %v1361
    %v1363 = vcombine.low %v1338, %v1346
    %v1364 = vcombine.high %v1338, %v1346
    %v1366 = vunpack.c.l.s4 1934713408
    %v1367 = vunpack.c.0.s8 %v1366
    %v1368 = vlaneseq
    %v1369 = vshrl.u32 %v1368, 7
    %v1370 = vsub.s32 %v1367, %v1369
    %v1371 = vrot.slane %v1363, %v1370
    %v1373 = vunpack.c.l.s4 1934713408
    %v1374 = vunpack.c.0.s8 %v1373
    %v1375 = vlaneseq
    %v1376 = vshrl.u32 %v1375, 7
    %v1377 = vsub.s32 %v1374, %v1376
    %v1378 = vrot.slane %v1364, %v1377
    %v1379 = vcombine.low %v1355, %v1371
    %v1380 = vcombine.high %v1355, %v1371
    %v1381 = vcombine.low %v1362, %v1378
    %v1382 = vcombine.high %v1362, %v1378
    %v1384 = vunpack.c.l.s4 1983009808
    %v1385 = vunpack.c.0.s8 %v1384
    %v1386 = vlaneseq
    %v1387 = vshrl.u32 %v1386, 7
    %v1388 = vsub.s32 %v1385, %v1387
    %v1389 = vrot.slane %v1212, %v1388
    %v1390 = vcombine.high %v1212, 0.0
    %v1392 = vunpack.c.l.s4 1983009808
    %v1393 = vunpack.c.0.s8 %v1392
    %v1394 = vlaneseq
    %v1395 = vshrl.u32 %v1394, 7
    %v1396 = vsub.s32 %v1393, %v1395
    %v1397 = vrot.slane %v1390, %v1396
    %v1398 = vcombine.low %v1389, %v1397
    %v1399 = vcombine.high %v1389, %v1397
    %v1401 = vunpack.c.l.s4 1934713408
    %v1402 = vunpack.c.0.s8 %v1401
    %v1403 = vlaneseq
    %v1404 = vshrl.u32 %v1403, 7
    %v1405 = vsub.s32 %v1402, %v1404
    %v1406 = vrot.slane %v1398, %v1405
    %v1408 = vunpack.c.l.s4 1934713408
    %v1409 = vunpack.c.0.s8 %v1408
    %v1410 = vlaneseq
    %v1411 = vshrl.u32 %v1410, 7
    %v1412 = vsub.s32 %v1409, %v1411
    %v1413 = vrot.slane %v1399, %v1412
    %v1414 = vcombine.high %v1406, 0.0
    %v1415 = vcombine.high %v1413, 0.0
    %vm1416 = vcmask 64512
    %v1418 = vsel %vm1416, %v514, 0
    %v1421 = vsel %vm1416, %v851, 0
    %v1424 = vsel %vm1416, %v878, 0
    %1426 = vmatprep.subr.mxu0 0.0
    %1427 = vmatpush1.xpose.msra.mxu0 0.0
    %1428 = vmatprep.subr.mxu0 0.0
    %1429 = vmatpush1.xpose.msra.mxu0 0.0
    %1430 = vmatprep.subr.mxu0 0.0
    %1431 = vmatpush1.xpose.msra.mxu0 0.0
    %1432 = vmatprep.subr.mxu0 0.0
    %1433 = vmatpush1.xpose.msra.mxu0 0.0
    %1434 = vmatprep.subr.mxu0 0.0
    %1435 = vmatpush1.xpose.msra.mxu0 0.0
    %1436 = vmatprep.subr.mxu0 0.0
    %1437 = vmatpush1.xpose.msra.mxu0 0.0
    %1438 = vmatprep.subr.mxu0 0.0
    %1439 = vmatpush1.xpose.msra.mxu0 0.0
    %1440 = vmatprep.subr.mxu0 0.0
    %1441 = vmatpush1.xpose.msra.mxu0 0.0
    %1442 = vmatprep.subr.mxu0 0.0
    %1443 = vmatpush1.xpose.msra.mxu0 0.0
    %1444 = vmatprep.subr.mxu0 0.0
    %1445 = vmatpush1.xpose.msra.mxu0 0.0
    %1446 = vmatprep.subr.mxu0 0.0
    %1447 = vmatpush1.xpose.msra.mxu0 0.0
    %1448 = vmatprep.subr.mxu0 0.0
    %1449 = vmatpush1.xpose.msra.mxu0 0.0
    %1450 = vmatprep.subr.mxu0 0.0
    %1451 = vmatpush1.xpose.msra.mxu0 0.0
    %1452 = vmatprep.subr.mxu0 0.0
    %1453 = vmatpush1.xpose.msra.mxu0 0.0
    %1454 = vmatprep.subr.mxu0 0.0
    %1455 = vmatpush1.xpose.msra.mxu0 %v1424
    %1456 = vmatprep.subr.mxu0 0.0
    %1457 = vmatpush1.xpose.msra.mxu0 %v1421
    %1458 = vmatprep.subr.mxu0 0.0
    %1459 = vmatpush2.xpose.msra.mxu0 0.0
    %1460 = vmatprep.subr.mxu0 0.0
    %1461 = vmatpush2.xpose.msra.mxu0 0.0
    %1462 = vmatprep.subr.mxu0 0.0
    %1463 = vmatpush2.xpose.msra.mxu0 0.0
    %1464 = vmatprep.subr.mxu0 0.0
    %1465 = vmatpush2.xpose.msra.mxu0 0.0
    %1466 = vmatprep.subr.mxu0 0.0
    %1467 = vmatpush2.xpose.msra.mxu0 0.0
    %1468 = vmatprep.subr.mxu0 0.0
    %1469 = vmatpush2.xpose.msra.mxu0 0.0
    %1470 = vmatprep.subr.mxu0 0.0
    %1471 = vmatpush2.xpose.msra.mxu0 0.0
    %1472 = vmatprep.subr.mxu0 0.0
    %1473 = vmatpush2.xpose.msra.mxu0 0.0
    %1474 = vmatprep.subr.mxu0 0.0
    %1475 = vmatpush2.xpose.msra.mxu0 0.0
    %1476 = vmatprep.subr.mxu0 0.0
    %1477 = vmatpush2.xpose.msra.mxu0 0.0
    %1478 = vmatprep.subr.mxu0 0.0
    %1479 = vmatpush2.xpose.msra.mxu0 0.0
    %1480 = vmatprep.subr.mxu0 0.0
    %1481 = vmatpush2.xpose.msra.mxu0 0.0
    %1482 = vmatprep.subr.mxu0 0.0
    %1483 = vmatpush2.xpose.msra.mxu0 0.0
    %1484 = vmatprep.subr.mxu0 0.0
    %1485 = vmatpush2.xpose.msra.mxu0 0.0
    %1486 = vmatprep.subr.mxu0 0.0
    %1487 = vmatpush2.xpose.msra.mxu0 0.0
    %1488 = vmatprep.subr.mxu0 0.0
    %1489 = vmatpush2.xpose.msra.mxu0 0.0
    %1490 = vmatprep.mubr.f32.mxu0 0.0
    %1491 = vmatmul.mubr.f32.gmra.mxu0 %v1418
    %v1492 = vpop.f32.mrf.mxu0
    %v1493 = vadd.f32 0.0, %v1492
    %v1494 = vpop.f32.mrf.mxu0
    %1495 = vdwg.mxu0
    %v1497 = vsel %vm1416, %v515, 0
    %v1500 = vsel %vm1416, %v852, 0
    %v1503 = vsel %vm1416, %v886, 0
    %1505 = vmatprep.subr.mxu0 0.0
    %1506 = vmatpush1.xpose.msra.mxu0 0.0
    %1507 = vmatprep.subr.mxu0 0.0
    %1508 = vmatpush1.xpose.msra.mxu0 0.0
    %1509 = vmatprep.subr.mxu0 0.0
    %1510 = vmatpush1.xpose.msra.mxu0 0.0
    %1511 = vmatprep.subr.mxu0 0.0
    %1512 = vmatpush1.xpose.msra.mxu0 0.0
    %1513 = vmatprep.subr.mxu0 0.0
    %1514 = vmatpush1.xpose.msra.mxu0 0.0
    %1515 = vmatprep.subr.mxu0 0.0
    %1516 = vmatpush1.xpose.msra.mxu0 0.0
    %1517 = vmatprep.subr.mxu0 0.0
    %1518 = vmatpush1.xpose.msra.mxu0 0.0
    %1519 = vmatprep.subr.mxu0 0.0
    %1520 = vmatpush1.xpose.msra.mxu0 0.0
    %1521 = vmatprep.subr.mxu0 0.0
    %1522 = vmatpush1.xpose.msra.mxu0 0.0
    %1523 = vmatprep.subr.mxu0 0.0
    %1524 = vmatpush1.xpose.msra.mxu0 0.0
    %1525 = vmatprep.subr.mxu0 0.0
    %1526 = vmatpush1.xpose.msra.mxu0 0.0
    %1527 = vmatprep.subr.mxu0 0.0
    %1528 = vmatpush1.xpose.msra.mxu0 0.0
    %1529 = vmatprep.subr.mxu0 0.0
    %1530 = vmatpush1.xpose.msra.mxu0 0.0
    %1531 = vmatprep.subr.mxu0 0.0
    %1532 = vmatpush1.xpose.msra.mxu0 0.0
    %1533 = vmatprep.subr.mxu0 0.0
    %1534 = vmatpush1.xpose.msra.mxu0 %v1503
    %1535 = vmatprep.subr.mxu0 0.0
    %1536 = vmatpush1.xpose.msra.mxu0 %v1500
    %1537 = vmatprep.subr.mxu0 0.0
    %1538 = vmatpush2.xpose.msra.mxu0 0.0
    %1539 = vmatprep.subr.mxu0 0.0
    %1540 = vmatpush2.xpose.msra.mxu0 0.0
    %1541 = vmatprep.subr.mxu0 0.0
    %1542 = vmatpush2.xpose.msra.mxu0 0.0
    %1543 = vmatprep.subr.mxu0 0.0
    %1544 = vmatpush2.xpose.msra.mxu0 0.0
    %1545 = vmatprep.subr.mxu0 0.0
    %1546 = vmatpush2.xpose.msra.mxu0 0.0
    %1547 = vmatprep.subr.mxu0 0.0
    %1548 = vmatpush2.xpose.msra.mxu0 0.0
    %1549 = vmatprep.subr.mxu0 0.0
    %1550 = vmatpush2.xpose.msra.mxu0 0.0
    %1551 = vmatprep.subr.mxu0 0.0
    %1552 = vmatpush2.xpose.msra.mxu0 0.0
    %1553 = vmatprep.subr.mxu0 0.0
    %1554 = vmatpush2.xpose.msra.mxu0 0.0
    %1555 = vmatprep.subr.mxu0 0.0
    %1556 = vmatpush2.xpose.msra.mxu0 0.0
    %1557 = vmatprep.subr.mxu0 0.0
    %1558 = vmatpush2.xpose.msra.mxu0 0.0
    %1559 = vmatprep.subr.mxu0 0.0
    %1560 = vmatpush2.xpose.msra.mxu0 0.0
    %1561 = vmatprep.subr.mxu0 0.0
    %1562 = vmatpush2.xpose.msra.mxu0 0.0
    %1563 = vmatprep.subr.mxu0 0.0
    %1564 = vmatpush2.xpose.msra.mxu0 0.0
    %1565 = vmatprep.subr.mxu0 0.0
    %1566 = vmatpush2.xpose.msra.mxu0 0.0
    %1567 = vmatprep.subr.mxu0 0.0
    %1568 = vmatpush2.xpose.msra.mxu0 0.0
    %1569 = vmatprep.mubr.f32.mxu0 0.0
    %1570 = vmatmul.mubr.f32.gmra.mxu0 %v1497
    %v1571 = vpop.f32.mrf.mxu0
    %v1572 = vadd.f32 0.0, %v1571
    %v1573 = vpop.f32.mrf.mxu0
    %1574 = vdwg.mxu0
    %v1576 = vsel %vm1416, %v516, 0
    %v1579 = vsel %vm1416, %v853, 0
    %v1582 = vsel %vm1416, %v885, 0
    %1584 = vmatprep.subr.mxu0 0.0
    %1585 = vmatpush1.xpose.msra.mxu0 0.0
    %1586 = vmatprep.subr.mxu0 0.0
    %1587 = vmatpush1.xpose.msra.mxu0 0.0
    %1588 = vmatprep.subr.mxu0 0.0
    %1589 = vmatpush1.xpose.msra.mxu0 0.0
    %1590 = vmatprep.subr.mxu0 0.0
    %1591 = vmatpush1.xpose.msra.mxu0 0.0
    %1592 = vmatprep.subr.mxu0 0.0
    %1593 = vmatpush1.xpose.msra.mxu0 0.0
    %1594 = vmatprep.subr.mxu0 0.0
    %1595 = vmatpush1.xpose.msra.mxu0 0.0
    %1596 = vmatprep.subr.mxu0 0.0
    %1597 = vmatpush1.xpose.msra.mxu0 0.0
    %1598 = vmatprep.subr.mxu0 0.0
    %1599 = vmatpush1.xpose.msra.mxu0 0.0
    %1600 = vmatprep.subr.mxu0 0.0
    %1601 = vmatpush1.xpose.msra.mxu0 0.0
    %1602 = vmatprep.subr.mxu0 0.0
    %1603 = vmatpush1.xpose.msra.mxu0 0.0
    %1604 = vmatprep.subr.mxu0 0.0
    %1605 = vmatpush1.xpose.msra.mxu0 0.0
    %1606 = vmatprep.subr.mxu0 0.0
    %1607 = vmatpush1.xpose.msra.mxu0 0.0
    %1608 = vmatprep.subr.mxu0 0.0
    %1609 = vmatpush1.xpose.msra.mxu0 0.0
    %1610 = vmatprep.subr.mxu0 0.0
    %1611 = vmatpush1.xpose.msra.mxu0 0.0
    %1612 = vmatprep.subr.mxu0 0.0
    %1613 = vmatpush1.xpose.msra.mxu0 %v1582
    %1614 = vmatprep.subr.mxu0 0.0
    %1615 = vmatpush1.xpose.msra.mxu0 %v1579
    %1616 = vmatprep.subr.mxu0 0.0
    %1617 = vmatpush2.xpose.msra.mxu0 0.0
    %1618 = vmatprep.subr.mxu0 0.0
    %1619 = vmatpush2.xpose.msra.mxu0 0.0
    %1620 = vmatprep.subr.mxu0 0.0
    %1621 = vmatpush2.xpose.msra.mxu0 0.0
    %1622 = vmatprep.subr.mxu0 0.0
    %1623 = vmatpush2.xpose.msra.mxu0 0.0
    %1624 = vmatprep.subr.mxu0 0.0
    %1625 = vmatpush2.xpose.msra.mxu0 0.0
    %1626 = vmatprep.subr.mxu0 0.0
    %1627 = vmatpush2.xpose.msra.mxu0 0.0
    %1628 = vmatprep.subr.mxu0 0.0
    %1629 = vmatpush2.xpose.msra.mxu0 0.0
    %1630 = vmatprep.subr.mxu0 0.0
    %1631 = vmatpush2.xpose.msra.mxu0 0.0
    %1632 = vmatprep.subr.mxu0 0.0
    %1633 = vmatpush2.xpose.msra.mxu0 0.0
    %1634 = vmatprep.subr.mxu0 0.0
    %1635 = vmatpush2.xpose.msra.mxu0 0.0
    %1636 = vmatprep.subr.mxu0 0.0
    %1637 = vmatpush2.xpose.msra.mxu0 0.0
    %1638 = vmatprep.subr.mxu0 0.0
    %1639 = vmatpush2.xpose.msra.mxu0 0.0
    %1640 = vmatprep.subr.mxu0 0.0
    %1641 = vmatpush2.xpose.msra.mxu0 0.0
    %1642 = vmatprep.subr.mxu0 0.0
    %1643 = vmatpush2.xpose.msra.mxu0 0.0
    %1644 = vmatprep.subr.mxu0 0.0
    %1645 = vmatpush2.xpose.msra.mxu0 0.0
    %1646 = vmatprep.subr.mxu0 0.0
    %1647 = vmatpush2.xpose.msra.mxu0 0.0
    %1648 = vmatprep.mubr.f32.mxu0 0.0
    %1649 = vmatmul.mubr.f32.gmra.mxu0 %v1576
    %v1650 = vpop.f32.mrf.mxu0
    %v1651 = vadd.f32 0.0, %v1650
    %v1652 = vpop.f32.mrf.mxu0
    %1653 = vdwg.mxu0
    %v1655 = vsel %vm1416, %v517, 0
    %v1658 = vsel %vm1416, %v854, 0
    %v1661 = vsel %vm1416, %v887, 0
    %1663 = vmatprep.subr.mxu0 0.0
    %1664 = vmatpush1.xpose.msra.mxu0 0.0
    %1665 = vmatprep.subr.mxu0 0.0
    %1666 = vmatpush1.xpose.msra.mxu0 0.0
    %1667 = vmatprep.subr.mxu0 0.0
    %1668 = vmatpush1.xpose.msra.mxu0 0.0
    %1669 = vmatprep.subr.mxu0 0.0
    %1670 = vmatpush1.xpose.msra.mxu0 0.0
    %1671 = vmatprep.subr.mxu0 0.0
    %1672 = vmatpush1.xpose.msra.mxu0 0.0
    %1673 = vmatprep.subr.mxu0 0.0
    %1674 = vmatpush1.xpose.msra.mxu0 0.0
    %1675 = vmatprep.subr.mxu0 0.0
    %1676 = vmatpush1.xpose.msra.mxu0 0.0
    %1677 = vmatprep.subr.mxu0 0.0
    %1678 = vmatpush1.xpose.msra.mxu0 0.0
    %1679 = vmatprep.subr.mxu0 0.0
    %1680 = vmatpush1.xpose.msra.mxu0 0.0
    %1681 = vmatprep.subr.mxu0 0.0
    %1682 = vmatpush1.xpose.msra.mxu0 0.0
    %1683 = vmatprep.subr.mxu0 0.0
    %1684 = vmatpush1.xpose.msra.mxu0 0.0
    %1685 = vmatprep.subr.mxu0 0.0
    %1686 = vmatpush1.xpose.msra.mxu0 0.0
    %1687 = vmatprep.subr.mxu0 0.0
    %1688 = vmatpush1.xpose.msra.mxu0 0.0
    %1689 = vmatprep.subr.mxu0 0.0
    %1690 = vmatpush1.xpose.msra.mxu0 0.0
    %1691 = vmatprep.subr.mxu0 0.0
    %1692 = vmatpush1.xpose.msra.mxu0 %v1661
    %1693 = vmatprep.subr.mxu0 0.0
    %1694 = vmatpush1.xpose.msra.mxu0 %v1658
    %1695 = vmatprep.subr.mxu0 0.0
    %1696 = vmatpush2.xpose.msra.mxu0 0.0
    %1697 = vmatprep.subr.mxu0 0.0
    %1698 = vmatpush2.xpose.msra.mxu0 0.0
    %1699 = vmatprep.subr.mxu0 0.0
    %1700 = vmatpush2.xpose.msra.mxu0 0.0
    %1701 = vmatprep.subr.mxu0 0.0
    %1702 = vmatpush2.xpose.msra.mxu0 0.0
    %1703 = vmatprep.subr.mxu0 0.0
    %1704 = vmatpush2.xpose.msra.mxu0 0.0
    %1705 = vmatprep.subr.mxu0 0.0
    %1706 = vmatpush2.xpose.msra.mxu0 0.0
    %1707 = vmatprep.subr.mxu0 0.0
    %1708 = vmatpush2.xpose.msra.mxu0 0.0
    %1709 = vmatprep.subr.mxu0 0.0
    %1710 = vmatpush2.xpose.msra.mxu0 0.0
    %1711 = vmatprep.subr.mxu0 0.0
    %1712 = vmatpush2.xpose.msra.mxu0 0.0
    %1713 = vmatprep.subr.mxu0 0.0
    %1714 = vmatpush2.xpose.msra.mxu0 0.0
    %1715 = vmatprep.subr.mxu0 0.0
    %1716 = vmatpush2.xpose.msra.mxu0 0.0
    %1717 = vmatprep.subr.mxu0 0.0
    %1718 = vmatpush2.xpose.msra.mxu0 0.0
    %1719 = vmatprep.subr.mxu0 0.0
    %1720 = vmatpush2.xpose.msra.mxu0 0.0
    %1721 = vmatprep.subr.mxu0 0.0
    %1722 = vmatpush2.xpose.msra.mxu0 0.0
    %1723 = vmatprep.subr.mxu0 0.0
    %1724 = vmatpush2.xpose.msra.mxu0 0.0
    %1725 = vmatprep.subr.mxu0 0.0
    %1726 = vmatpush2.xpose.msra.mxu0 0.0
    %1727 = vmatprep.mubr.f32.mxu0 0.0
    %1728 = vmatmul.mubr.f32.gmra.mxu0 %v1655
    %v1729 = vpop.f32.mrf.mxu0
    %v1730 = vadd.f32 0.0, %v1729
    %v1731 = vpop.f32.mrf.mxu0
    %1732 = vdwg.mxu0
    %v1734 = vsel %vm1416, %v582, 0
    %v1737 = vsel %vm1416, %v952, 0
    %v1740 = vsel %vm1416, %v979, 0
    %1742 = vmatprep.subr.mxu0 0.0
    %1743 = vmatpush1.xpose.msra.mxu0 0.0
    %1744 = vmatprep.subr.mxu0 0.0
    %1745 = vmatpush1.xpose.msra.mxu0 0.0
    %1746 = vmatprep.subr.mxu0 0.0
    %1747 = vmatpush1.xpose.msra.mxu0 0.0
    %1748 = vmatprep.subr.mxu0 0.0
    %1749 = vmatpush1.xpose.msra.mxu0 0.0
    %1750 = vmatprep.subr.mxu0 0.0
    %1751 = vmatpush1.xpose.msra.mxu0 0.0
    %1752 = vmatprep.subr.mxu0 0.0
    %1753 = vmatpush1.xpose.msra.mxu0 0.0
    %1754 = vmatprep.subr.mxu0 0.0
    %1755 = vmatpush1.xpose.msra.mxu0 0.0
    %1756 = vmatprep.subr.mxu0 0.0
    %1757 = vmatpush1.xpose.msra.mxu0 0.0
    %1758 = vmatprep.subr.mxu0 0.0
    %1759 = vmatpush1.xpose.msra.mxu0 0.0
    %1760 = vmatprep.subr.mxu0 0.0
    %1761 = vmatpush1.xpose.msra.mxu0 0.0
    %1762 = vmatprep.subr.mxu0 0.0
    %1763 = vmatpush1.xpose.msra.mxu0 0.0
    %1764 = vmatprep.subr.mxu0 0.0
    %1765 = vmatpush1.xpose.msra.mxu0 0.0
    %1766 = vmatprep.subr.mxu0 0.0
    %1767 = vmatpush1.xpose.msra.mxu0 0.0
    %1768 = vmatprep.subr.mxu0 0.0
    %1769 = vmatpush1.xpose.msra.mxu0 0.0
    %1770 = vmatprep.subr.mxu0 0.0
    %1771 = vmatpush1.xpose.msra.mxu0 %v1740
    %1772 = vmatprep.subr.mxu0 0.0
    %1773 = vmatpush1.xpose.msra.mxu0 %v1737
    %1774 = vmatprep.subr.mxu0 0.0
    %1775 = vmatpush2.xpose.msra.mxu0 0.0
    %1776 = vmatprep.subr.mxu0 0.0
    %1777 = vmatpush2.xpose.msra.mxu0 0.0
    %1778 = vmatprep.subr.mxu0 0.0
    %1779 = vmatpush2.xpose.msra.mxu0 0.0
    %1780 = vmatprep.subr.mxu0 0.0
    %1781 = vmatpush2.xpose.msra.mxu0 0.0
    %1782 = vmatprep.subr.mxu0 0.0
    %1783 = vmatpush2.xpose.msra.mxu0 0.0
    %1784 = vmatprep.subr.mxu0 0.0
    %1785 = vmatpush2.xpose.msra.mxu0 0.0
    %1786 = vmatprep.subr.mxu0 0.0
    %1787 = vmatpush2.xpose.msra.mxu0 0.0
    %1788 = vmatprep.subr.mxu0 0.0
    %1789 = vmatpush2.xpose.msra.mxu0 0.0
    %1790 = vmatprep.subr.mxu0 0.0
    %1791 = vmatpush2.xpose.msra.mxu0 0.0
    %1792 = vmatprep.subr.mxu0 0.0
    %1793 = vmatpush2.xpose.msra.mxu0 0.0
    %1794 = vmatprep.subr.mxu0 0.0
    %1795 = vmatpush2.xpose.msra.mxu0 0.0
    %1796 = vmatprep.subr.mxu0 0.0
    %1797 = vmatpush2.xpose.msra.mxu0 0.0
    %1798 = vmatprep.subr.mxu0 0.0
    %1799 = vmatpush2.xpose.msra.mxu0 0.0
    %1800 = vmatprep.subr.mxu0 0.0
    %1801 = vmatpush2.xpose.msra.mxu0 0.0
    %1802 = vmatprep.subr.mxu0 0.0
    %1803 = vmatpush2.xpose.msra.mxu0 0.0
    %1804 = vmatprep.subr.mxu0 0.0
    %1805 = vmatpush2.xpose.msra.mxu0 0.0
    %1806 = vmatprep.mubr.f32.mxu0 0.0
    %1807 = vmatmul.mubr.f32.gmra.mxu0 %v1734
    %v1808 = vpop.f32.mrf.mxu0
    %v1809 = vadd.f32 0.0, %v1808
    %v1810 = vpop.f32.mrf.mxu0
    %1811 = vdwg.mxu0
    %v1813 = vsel %vm1416, %v583, 0
    %v1816 = vsel %vm1416, %v953, 0
    %v1819 = vsel %vm1416, %v987, 0
    %1821 = vmatprep.subr.mxu0 0.0
    %1822 = vmatpush1.xpose.msra.mxu0 0.0
    %1823 = vmatprep.subr.mxu0 0.0
    %1824 = vmatpush1.xpose.msra.mxu0 0.0
    %1825 = vmatprep.subr.mxu0 0.0
    %1826 = vmatpush1.xpose.msra.mxu0 0.0
    %1827 = vmatprep.subr.mxu0 0.0
    %1828 = vmatpush1.xpose.msra.mxu0 0.0
    %1829 = vmatprep.subr.mxu0 0.0
    %1830 = vmatpush1.xpose.msra.mxu0 0.0
    %1831 = vmatprep.subr.mxu0 0.0
    %1832 = vmatpush1.xpose.msra.mxu0 0.0
    %1833 = vmatprep.subr.mxu0 0.0
    %1834 = vmatpush1.xpose.msra.mxu0 0.0
    %1835 = vmatprep.subr.mxu0 0.0
    %1836 = vmatpush1.xpose.msra.mxu0 0.0
    %1837 = vmatprep.subr.mxu0 0.0
    %1838 = vmatpush1.xpose.msra.mxu0 0.0
    %1839 = vmatprep.subr.mxu0 0.0
    %1840 = vmatpush1.xpose.msra.mxu0 0.0
    %1841 = vmatprep.subr.mxu0 0.0
    %1842 = vmatpush1.xpose.msra.mxu0 0.0
    %1843 = vmatprep.subr.mxu0 0.0
    %1844 = vmatpush1.xpose.msra.mxu0 0.0
    %1845 = vmatprep.subr.mxu0 0.0
    %1846 = vmatpush1.xpose.msra.mxu0 0.0
    %1847 = vmatprep.subr.mxu0 0.0
    %1848 = vmatpush1.xpose.msra.mxu0 0.0
    %1849 = vmatprep.subr.mxu0 0.0
    %1850 = vmatpush1.xpose.msra.mxu0 %v1819
    %1851 = vmatprep.subr.mxu0 0.0
    %1852 = vmatpush1.xpose.msra.mxu0 %v1816
    %1853 = vmatprep.subr.mxu0 0.0
    %1854 = vmatpush2.xpose.msra.mxu0 0.0
    %1855 = vmatprep.subr.mxu0 0.0
    %1856 = vmatpush2.xpose.msra.mxu0 0.0
    %1857 = vmatprep.subr.mxu0 0.0
    %1858 = vmatpush2.xpose.msra.mxu0 0.0
    %1859 = vmatprep.subr.mxu0 0.0
    %1860 = vmatpush2.xpose.msra.mxu0 0.0
    %1861 = vmatprep.subr.mxu0 0.0
    %1862 = vmatpush2.xpose.msra.mxu0 0.0
    %1863 = vmatprep.subr.mxu0 0.0
    %1864 = vmatpush2.xpose.msra.mxu0 0.0
    %1865 = vmatprep.subr.mxu0 0.0
    %1866 = vmatpush2.xpose.msra.mxu0 0.0
    %1867 = vmatprep.subr.mxu0 0.0
    %1868 = vmatpush2.xpose.msra.mxu0 0.0
    %1869 = vmatprep.subr.mxu0 0.0
    %1870 = vmatpush2.xpose.msra.mxu0 0.0
    %1871 = vmatprep.subr.mxu0 0.0
    %1872 = vmatpush2.xpose.msra.mxu0 0.0
    %1873 = vmatprep.subr.mxu0 0.0
    %1874 = vmatpush2.xpose.msra.mxu0 0.0
    %1875 = vmatprep.subr.mxu0 0.0
    %1876 = vmatpush2.xpose.msra.mxu0 0.0
    %1877 = vmatprep.subr.mxu0 0.0
    %1878 = vmatpush2.xpose.msra.mxu0 0.0
    %1879 = vmatprep.subr.mxu0 0.0
    %1880 = vmatpush2.xpose.msra.mxu0 0.0
    %1881 = vmatprep.subr.mxu0 0.0
    %1882 = vmatpush2.xpose.msra.mxu0 0.0
    %1883 = vmatprep.subr.mxu0 0.0
    %1884 = vmatpush2.xpose.msra.mxu0 0.0
    %1885 = vmatprep.mubr.f32.mxu0 0.0
    %1886 = vmatmul.mubr.f32.gmra.mxu0 %v1813
    %v1887 = vpop.f32.mrf.mxu0
    %v1888 = vadd.f32 0.0, %v1887
    %v1889 = vpop.f32.mrf.mxu0
    %1890 = vdwg.mxu0
    %v1892 = vsel %vm1416, %v584, 0
    %v1895 = vsel %vm1416, %v954, 0
    %v1898 = vsel %vm1416, %v986, 0
    %1900 = vmatprep.subr.mxu0 0.0
    %1901 = vmatpush1.xpose.msra.mxu0 0.0
    %1902 = vmatprep.subr.mxu0 0.0
    %1903 = vmatpush1.xpose.msra.mxu0 0.0
    %1904 = vmatprep.subr.mxu0 0.0
    %1905 = vmatpush1.xpose.msra.mxu0 0.0
    %1906 = vmatprep.subr.mxu0 0.0
    %1907 = vmatpush1.xpose.msra.mxu0 0.0
    %1908 = vmatprep.subr.mxu0 0.0
    %1909 = vmatpush1.xpose.msra.mxu0 0.0
    %1910 = vmatprep.subr.mxu0 0.0
    %1911 = vmatpush1.xpose.msra.mxu0 0.0
    %1912 = vmatprep.subr.mxu0 0.0
    %1913 = vmatpush1.xpose.msra.mxu0 0.0
    %1914 = vmatprep.subr.mxu0 0.0
    %1915 = vmatpush1.xpose.msra.mxu0 0.0
    %1916 = vmatprep.subr.mxu0 0.0
    %1917 = vmatpush1.xpose.msra.mxu0 0.0
    %1918 = vmatprep.subr.mxu0 0.0
    %1919 = vmatpush1.xpose.msra.mxu0 0.0
    %1920 = vmatprep.subr.mxu0 0.0
    %1921 = vmatpush1.xpose.msra.mxu0 0.0
    %1922 = vmatprep.subr.mxu0 0.0
    %1923 = vmatpush1.xpose.msra.mxu0 0.0
    %1924 = vmatprep.subr.mxu0 0.0
    %1925 = vmatpush1.xpose.msra.mxu0 0.0
    %1926 = vmatprep.subr.mxu0 0.0
    %1927 = vmatpush1.xpose.msra.mxu0 0.0
    %1928 = vmatprep.subr.mxu0 0.0
    %1929 = vmatpush1.xpose.msra.mxu0 %v1898
    %1930 = vmatprep.subr.mxu0 0.0
    %1931 = vmatpush1.xpose.msra.mxu0 %v1895
    %1932 = vmatprep.subr.mxu0 0.0
    %1933 = vmatpush2.xpose.msra.mxu0 0.0
    %1934 = vmatprep.subr.mxu0 0.0
    %1935 = vmatpush2.xpose.msra.mxu0 0.0
    %1936 = vmatprep.subr.mxu0 0.0
    %1937 = vmatpush2.xpose.msra.mxu0 0.0
    %1938 = vmatprep.subr.mxu0 0.0
    %1939 = vmatpush2.xpose.msra.mxu0 0.0
    %1940 = vmatprep.subr.mxu0 0.0
    %1941 = vmatpush2.xpose.msra.mxu0 0.0
    %1942 = vmatprep.subr.mxu0 0.0
    %1943 = vmatpush2.xpose.msra.mxu0 0.0
    %1944 = vmatprep.subr.mxu0 0.0
    %1945 = vmatpush2.xpose.msra.mxu0 0.0
    %1946 = vmatprep.subr.mxu0 0.0
    %1947 = vmatpush2.xpose.msra.mxu0 0.0
    %1948 = vmatprep.subr.mxu0 0.0
    %1949 = vmatpush2.xpose.msra.mxu0 0.0
    %1950 = vmatprep.subr.mxu0 0.0
    %1951 = vmatpush2.xpose.msra.mxu0 0.0
    %1952 = vmatprep.subr.mxu0 0.0
    %1953 = vmatpush2.xpose.msra.mxu0 0.0
    %1954 = vmatprep.subr.mxu0 0.0
    %1955 = vmatpush2.xpose.msra.mxu0 0.0
    %1956 = vmatprep.subr.mxu0 0.0
    %1957 = vmatpush2.xpose.msra.mxu0 0.0
    %1958 = vmatprep.subr.mxu0 0.0
    %1959 = vmatpush2.xpose.msra.mxu0 0.0
    %1960 = vmatprep.subr.mxu0 0.0
    %1961 = vmatpush2.xpose.msra.mxu0 0.0
    %1962 = vmatprep.subr.mxu0 0.0
    %1963 = vmatpush2.xpose.msra.mxu0 0.0
    %1964 = vmatprep.mubr.f32.mxu0 0.0
    %1965 = vmatmul.mubr.f32.gmra.mxu0 %v1892
    %v1966 = vpop.f32.mrf.mxu0
    %v1967 = vadd.f32 0.0, %v1966
    %v1968 = vpop.f32.mrf.mxu0
    %1969 = vdwg.mxu0
    %v1971 = vsel %vm1416, %v585, 0
    %v1974 = vsel %vm1416, %v955, 0
    %v1977 = vsel %vm1416, %v988, 0
    %1979 = vmatprep.subr.mxu0 0.0
    %1980 = vmatpush1.xpose.msra.mxu0 0.0
    %1981 = vmatprep.subr.mxu0 0.0
    %1982 = vmatpush1.xpose.msra.mxu0 0.0
    %1983 = vmatprep.subr.mxu0 0.0
    %1984 = vmatpush1.xpose.msra.mxu0 0.0
    %1985 = vmatprep.subr.mxu0 0.0
    %1986 = vmatpush1.xpose.msra.mxu0 0.0
    %1987 = vmatprep.subr.mxu0 0.0
    %1988 = vmatpush1.xpose.msra.mxu0 0.0
    %1989 = vmatprep.subr.mxu0 0.0
    %1990 = vmatpush1.xpose.msra.mxu0 0.0
    %1991 = vmatprep.subr.mxu0 0.0
    %1992 = vmatpush1.xpose.msra.mxu0 0.0
    %1993 = vmatprep.subr.mxu0 0.0
    %1994 = vmatpush1.xpose.msra.mxu0 0.0
    %1995 = vmatprep.subr.mxu0 0.0
    %1996 = vmatpush1.xpose.msra.mxu0 0.0
    %1997 = vmatprep.subr.mxu0 0.0
    %1998 = vmatpush1.xpose.msra.mxu0 0.0
    %1999 = vmatprep.subr.mxu0 0.0
    %2000 = vmatpush1.xpose.msra.mxu0 0.0
    %2001 = vmatprep.subr.mxu0 0.0
    %2002 = vmatpush1.xpose.msra.mxu0 0.0
    %2003 = vmatprep.subr.mxu0 0.0
    %2004 = vmatpush1.xpose.msra.mxu0 0.0
    %2005 = vmatprep.subr.mxu0 0.0
    %2006 = vmatpush1.xpose.msra.mxu0 0.0
    %2007 = vmatprep.subr.mxu0 0.0
    %2008 = vmatpush1.xpose.msra.mxu0 %v1977
    %2009 = vmatprep.subr.mxu0 0.0
    %2010 = vmatpush1.xpose.msra.mxu0 %v1974
    %2011 = vmatprep.subr.mxu0 0.0
    %2012 = vmatpush2.xpose.msra.mxu0 0.0
    %2013 = vmatprep.subr.mxu0 0.0
    %2014 = vmatpush2.xpose.msra.mxu0 0.0
    %2015 = vmatprep.subr.mxu0 0.0
    %2016 = vmatpush2.xpose.msra.mxu0 0.0
    %2017 = vmatprep.subr.mxu0 0.0
    %2018 = vmatpush2.xpose.msra.mxu0 0.0
    %2019 = vmatprep.subr.mxu0 0.0
    %2020 = vmatpush2.xpose.msra.mxu0 0.0
    %2021 = vmatprep.subr.mxu0 0.0
    %2022 = vmatpush2.xpose.msra.mxu0 0.0
    %2023 = vmatprep.subr.mxu0 0.0
    %2024 = vmatpush2.xpose.msra.mxu0 0.0
    %2025 = vmatprep.subr.mxu0 0.0
    %2026 = vmatpush2.xpose.msra.mxu0 0.0
    %2027 = vmatprep.subr.mxu0 0.0
    %2028 = vmatpush2.xpose.msra.mxu0 0.0
    %2029 = vmatprep.subr.mxu0 0.0
    %2030 = vmatpush2.xpose.msra.mxu0 0.0
    %2031 = vmatprep.subr.mxu0 0.0
    %2032 = vmatpush2.xpose.msra.mxu0 0.0
    %2033 = vmatprep.subr.mxu0 0.0
    %2034 = vmatpush2.xpose.msra.mxu0 0.0
    %2035 = vmatprep.subr.mxu0 0.0
    %2036 = vmatpush2.xpose.msra.mxu0 0.0
    %2037 = vmatprep.subr.mxu0 0.0
    %2038 = vmatpush2.xpose.msra.mxu0 0.0
    %2039 = vmatprep.subr.mxu0 0.0
    %2040 = vmatpush2.xpose.msra.mxu0 0.0
    %2041 = vmatprep.subr.mxu0 0.0
    %2042 = vmatpush2.xpose.msra.mxu0 0.0
    %2043 = vmatprep.mubr.f32.mxu0 0.0
    %2044 = vmatmul.mubr.f32.gmra.mxu0 %v1971
    %v2045 = vpop.f32.mrf.mxu0
    %v2046 = vadd.f32 0.0, %v2045
    %v2047 = vpop.f32.mrf.mxu0
    %2048 = vdwg.mxu0
    %vm2049 = vcmask 80896
    %v2050 = vsel %vm2049, %v1493, -inf
    %2051 = vmax.xlane.f32.xlu0 %v2050
    %v2052 = vpop.xlane.xlu0 %2051
    %v2053 = vsel %vm2049, %v1572, -inf
    %2054 = vmax.xlane.f32.xlu0 %v2053
    %v2055 = vpop.xlane.xlu0 %2054
    %v2056 = vsel %vm2049, %v1651, -inf
    %2057 = vmax.xlane.f32.xlu0 %v2056
    %v2058 = vpop.xlane.xlu0 %2057
    %v2059 = vsel %vm2049, %v1730, -inf
    %2060 = vmax.xlane.f32.xlu0 %v2059
    %v2061 = vpop.xlane.xlu0 %2060
    %v2062 = vsel %vm2049, %v1809, -inf
    %2063 = vmax.xlane.f32.xlu0 %v2062
    %v2064 = vpop.xlane.xlu0 %2063
    %v2065 = vsel %vm2049, %v1888, -inf
    %2066 = vmax.xlane.f32.xlu0 %v2065
    %v2067 = vpop.xlane.xlu0 %2066
    %v2068 = vsel %vm2049, %v1967, -inf
    %2069 = vmax.xlane.f32.xlu0 %v2068
    %v2070 = vpop.xlane.xlu0 %2069
    %v2071 = vsel %vm2049, %v2046, -inf
    %2072 = vmax.xlane.f32.xlu0 %v2071
    %v2073 = vpop.xlane.xlu0 %2072
    %v2074 = vsub.f32 %v1493, %v2052
    %v2075 = vsub.f32 %v1572, %v2055
    %v2076 = vsub.f32 %v1651, %v2058
    %v2077 = vsub.f32 %v1730, %v2061
    %v2078 = vsub.f32 %v1809, %v2064
    %v2079 = vsub.f32 %v1888, %v2067
    %v2080 = vsub.f32 %v1967, %v2070
    %v2081 = vsub.f32 %v2046, %v2073
    %v2082 = vmul.f32 %v2074, 1.442695
    %v2083 = vpow.pop %v2082
    %v2084 = vmul.f32 %v2075, 1.442695
    %v2085 = vpow.pop %v2084
    %v2086 = vmul.f32 %v2076, 1.442695
    %v2087 = vpow.pop %v2086
    %v2088 = vmul.f32 %v2077, 1.442695
    %v2089 = vpow.pop %v2088
    %v2090 = vmul.f32 %v2078, 1.442695
    %v2091 = vpow.pop %v2090
    %v2092 = vmul.f32 %v2079, 1.442695
    %v2093 = vpow.pop %v2092
    %v2094 = vmul.f32 %v2080, 1.442695
    %v2095 = vpow.pop %v2094
    %v2096 = vmul.f32 %v2081, 1.442695
    %v2097 = vpow.pop %v2096
    %v2098 = vsel %vm2049, %v2083, 0.0
    %2099 = vadd.xlane.f32.xlu0 %v2098
    %v2100 = vpop.xlane.xlu0 %2099
    %v2101 = vsel %vm2049, %v2085, 0.0
    %2102 = vadd.xlane.f32.xlu0 %v2101
    %v2103 = vpop.xlane.xlu0 %2102
    %v2104 = vsel %vm2049, %v2087, 0.0
    %2105 = vadd.xlane.f32.xlu0 %v2104
    %v2106 = vpop.xlane.xlu0 %2105
    %v2107 = vsel %vm2049, %v2089, 0.0
    %2108 = vadd.xlane.f32.xlu0 %v2107
    %v2109 = vpop.xlane.xlu0 %2108
    %v2110 = vsel %vm2049, %v2091, 0.0
    %2111 = vadd.xlane.f32.xlu0 %v2110
    %v2112 = vpop.xlane.xlu0 %2111
    %v2113 = vsel %vm2049, %v2093, 0.0
    %2114 = vadd.xlane.f32.xlu0 %v2113
    %v2115 = vpop.xlane.xlu0 %2114
    %v2116 = vsel %vm2049, %v2095, 0.0
    %2117 = vadd.xlane.f32.xlu0 %v2116
    %v2118 = vpop.xlane.xlu0 %2117
    %v2119 = vsel %vm2049, %v2097, 0.0
    %2120 = vadd.xlane.f32.xlu0 %v2119
    %v2121 = vpop.xlane.xlu0 %2120
    %v2122 = vrcp.pop %v2100
    %v2123 = vrcp.pop %v2103
    %v2124 = vrcp.pop %v2106
    %v2125 = vrcp.pop %v2109
    %v2126 = vrcp.pop %v2112
    %v2127 = vrcp.pop %v2115
    %v2128 = vrcp.pop %v2118
    %v2129 = vrcp.pop %v2121
    %v2130 = vmul.f32 %v2083, %v2122
    %v2131 = vmul.f32 %v2085, %v2123
    %v2132 = vmul.f32 %v2087, %v2124
    %v2133 = vmul.f32 %v2089, %v2125
    %v2134 = vmul.f32 %v2091, %v2126
    %v2135 = vmul.f32 %v2093, %v2127
    %v2136 = vmul.f32 %v2095, %v2128
    %v2137 = vmul.f32 %v2097, %v2129
    %v2139 = vsel %vm2049, %v2130, 0
    %vm2141 = vcmask 1041408
    %v2143 = vsel %vm2141, %v1305, 0
    %2145 = vmatprep.subr.mxu0 0.0
    %2146 = vmatpush1.msra.mxu0 0.0
    %2147 = vmatprep.subr.mxu0 0.0
    %2148 = vmatpush1.msra.mxu0 0.0
    %2149 = vmatprep.subr.mxu0 0.0
    %2150 = vmatpush1.msra.mxu0 0.0
    %2151 = vmatprep.subr.mxu0 0.0
    %2152 = vmatpush1.msra.mxu0 0.0
    %2153 = vmatprep.subr.mxu0 0.0
    %2154 = vmatpush1.msra.mxu0 0.0
    %2155 = vmatprep.subr.mxu0 0.0
    %2156 = vmatpush1.msra.mxu0 0.0
    %2157 = vmatprep.subr.mxu0 0.0
    %2158 = vmatpush1.msra.mxu0 0.0
    %2159 = vmatprep.subr.mxu0 0.0
    %2160 = vmatpush1.msra.mxu0 0.0
    %2161 = vmatprep.subr.mxu0 0.0
    %2162 = vmatpush1.msra.mxu0 0.0
    %2163 = vmatprep.subr.mxu0 0.0
    %2164 = vmatpush1.msra.mxu0 0.0
    %2165 = vmatprep.subr.mxu0 0.0
    %2166 = vmatpush1.msra.mxu0 0.0
    %2167 = vmatprep.subr.mxu0 0.0
    %2168 = vmatpush1.msra.mxu0 0.0
    %2169 = vmatprep.subr.mxu0 0.0
    %2170 = vmatpush1.msra.mxu0 0.0
    %2171 = vmatprep.subr.mxu0 0.0
    %2172 = vmatpush1.msra.mxu0 0.0
    %2173 = vmatprep.subr.mxu0 0.0
    %2174 = vmatpush1.msra.mxu0 %v2143
    %2175 = vmatprep.subr.mxu0 0.0
    %2176 = vmatpush1.msra.mxu0 %v1278
    %2177 = vmatprep.subr.mxu0 0.0
    %2178 = vmatpush2.msra.mxu0 0.0
    %2179 = vmatprep.subr.mxu0 0.0
    %2180 = vmatpush2.msra.mxu0 0.0
    %2181 = vmatprep.subr.mxu0 0.0
    %2182 = vmatpush2.msra.mxu0 0.0
    %2183 = vmatprep.subr.mxu0 0.0
    %2184 = vmatpush2.msra.mxu0 0.0
    %2185 = vmatprep.subr.mxu0 0.0
    %2186 = vmatpush2.msra.mxu0 0.0
    %2187 = vmatprep.subr.mxu0 0.0
    %2188 = vmatpush2.msra.mxu0 0.0
    %2189 = vmatprep.subr.mxu0 0.0
    %2190 = vmatpush2.msra.mxu0 0.0
    %2191 = vmatprep.subr.mxu0 0.0
    %2192 = vmatpush2.msra.mxu0 0.0
    %2193 = vmatprep.subr.mxu0 0.0
    %2194 = vmatpush2.msra.mxu0 0.0
    %2195 = vmatprep.subr.mxu0 0.0
    %2196 = vmatpush2.msra.mxu0 0.0
    %2197 = vmatprep.subr.mxu0 0.0
    %2198 = vmatpush2.msra.mxu0 0.0
    %2199 = vmatprep.subr.mxu0 0.0
    %2200 = vmatpush2.msra.mxu0 0.0
    %2201 = vmatprep.subr.mxu0 0.0
    %2202 = vmatpush2.msra.mxu0 0.0
    %2203 = vmatprep.subr.mxu0 0.0
    %2204 = vmatpush2.msra.mxu0 0.0
    %2205 = vmatprep.subr.mxu0 0.0
    %2206 = vmatpush2.msra.mxu0 0.0
    %2207 = vmatprep.subr.mxu0 0.0
    %2208 = vmatpush2.msra.mxu0 0.0
    %2209 = vmatprep.mubr.f32.mxu0 0.0
    %2210 = vmatmul.mubr.f32.gmra.mxu0 %v2139
    %v2211 = vpop.f32.mrf.mxu0
    %v2212 = vadd.f32 0.0, %v2211
    %v2213 = vpop.f32.mrf.mxu0
    %2214 = vdwg.mxu0
    %v2216 = vsel %vm2049, %v2131, 0
    %v2219 = vsel %vm2141, %v1313, 0
    %2221 = vmatprep.subr.mxu0 0.0
    %2222 = vmatpush1.msra.mxu0 0.0
    %2223 = vmatprep.subr.mxu0 0.0
    %2224 = vmatpush1.msra.mxu0 0.0
    %2225 = vmatprep.subr.mxu0 0.0
    %2226 = vmatpush1.msra.mxu0 0.0
    %2227 = vmatprep.subr.mxu0 0.0
    %2228 = vmatpush1.msra.mxu0 0.0
    %2229 = vmatprep.subr.mxu0 0.0
    %2230 = vmatpush1.msra.mxu0 0.0
    %2231 = vmatprep.subr.mxu0 0.0
    %2232 = vmatpush1.msra.mxu0 0.0
    %2233 = vmatprep.subr.mxu0 0.0
    %2234 = vmatpush1.msra.mxu0 0.0
    %2235 = vmatprep.subr.mxu0 0.0
    %2236 = vmatpush1.msra.mxu0 0.0
    %2237 = vmatprep.subr.mxu0 0.0
    %2238 = vmatpush1.msra.mxu0 0.0
    %2239 = vmatprep.subr.mxu0 0.0
    %2240 = vmatpush1.msra.mxu0 0.0
    %2241 = vmatprep.subr.mxu0 0.0
    %2242 = vmatpush1.msra.mxu0 0.0
    %2243 = vmatprep.subr.mxu0 0.0
    %2244 = vmatpush1.msra.mxu0 0.0
    %2245 = vmatprep.subr.mxu0 0.0
    %2246 = vmatpush1.msra.mxu0 0.0
    %2247 = vmatprep.subr.mxu0 0.0
    %2248 = vmatpush1.msra.mxu0 0.0
    %2249 = vmatprep.subr.mxu0 0.0
    %2250 = vmatpush1.msra.mxu0 %v2219
    %2251 = vmatprep.subr.mxu0 0.0
    %2252 = vmatpush1.msra.mxu0 %v1279
    %2253 = vmatprep.subr.mxu0 0.0
    %2254 = vmatpush2.msra.mxu0 0.0
    %2255 = vmatprep.subr.mxu0 0.0
    %2256 = vmatpush2.msra.mxu0 0.0
    %2257 = vmatprep.subr.mxu0 0.0
    %2258 = vmatpush2.msra.mxu0 0.0
    %2259 = vmatprep.subr.mxu0 0.0
    %2260 = vmatpush2.msra.mxu0 0.0
    %2261 = vmatprep.subr.mxu0 0.0
    %2262 = vmatpush2.msra.mxu0 0.0
    %2263 = vmatprep.subr.mxu0 0.0
    %2264 = vmatpush2.msra.mxu0 0.0
    %2265 = vmatprep.subr.mxu0 0.0
    %2266 = vmatpush2.msra.mxu0 0.0
    %2267 = vmatprep.subr.mxu0 0.0
    %2268 = vmatpush2.msra.mxu0 0.0
    %2269 = vmatprep.subr.mxu0 0.0
    %2270 = vmatpush2.msra.mxu0 0.0
    %2271 = vmatprep.subr.mxu0 0.0
    %2272 = vmatpush2.msra.mxu0 0.0
    %2273 = vmatprep.subr.mxu0 0.0
    %2274 = vmatpush2.msra.mxu0 0.0
    %2275 = vmatprep.subr.mxu0 0.0
    %2276 = vmatpush2.msra.mxu0 0.0
    %2277 = vmatprep.subr.mxu0 0.0
    %2278 = vmatpush2.msra.mxu0 0.0
    %2279 = vmatprep.subr.mxu0 0.0
    %2280 = vmatpush2.msra.mxu0 0.0
    %2281 = vmatprep.subr.mxu0 0.0
    %2282 = vmatpush2.msra.mxu0 0.0
    %2283 = vmatprep.subr.mxu0 0.0
    %2284 = vmatpush2.msra.mxu0 0.0
    %2285 = vmatprep.mubr.f32.mxu0 0.0
    %2286 = vmatmul.mubr.f32.gmra.mxu0 %v2216
    %v2287 = vpop.f32.mrf.mxu0
    %v2288 = vadd.f32 0.0, %v2287
    %v2289 = vpop.f32.mrf.mxu0
    %2290 = vdwg.mxu0
    %v2292 = vsel %vm2049, %v2132, 0
    %v2295 = vsel %vm2141, %v1312, 0
    %2297 = vmatprep.subr.mxu0 0.0
    %2298 = vmatpush1.msra.mxu0 0.0
    %2299 = vmatprep.subr.mxu0 0.0
    %2300 = vmatpush1.msra.mxu0 0.0
    %2301 = vmatprep.subr.mxu0 0.0
    %2302 = vmatpush1.msra.mxu0 0.0
    %2303 = vmatprep.subr.mxu0 0.0
    %2304 = vmatpush1.msra.mxu0 0.0
    %2305 = vmatprep.subr.mxu0 0.0
    %2306 = vmatpush1.msra.mxu0 0.0
    %2307 = vmatprep.subr.mxu0 0.0
    %2308 = vmatpush1.msra.mxu0 0.0
    %2309 = vmatprep.subr.mxu0 0.0
    %2310 = vmatpush1.msra.mxu0 0.0
    %2311 = vmatprep.subr.mxu0 0.0
    %2312 = vmatpush1.msra.mxu0 0.0
    %2313 = vmatprep.subr.mxu0 0.0
    %2314 = vmatpush1.msra.mxu0 0.0
    %2315 = vmatprep.subr.mxu0 0.0
    %2316 = vmatpush1.msra.mxu0 0.0
    %2317 = vmatprep.subr.mxu0 0.0
    %2318 = vmatpush1.msra.mxu0 0.0
    %2319 = vmatprep.subr.mxu0 0.0
    %2320 = vmatpush1.msra.mxu0 0.0
    %2321 = vmatprep.subr.mxu0 0.0
    %2322 = vmatpush1.msra.mxu0 0.0
    %2323 = vmatprep.subr.mxu0 0.0
    %2324 = vmatpush1.msra.mxu0 0.0
    %2325 = vmatprep.subr.mxu0 0.0
    %2326 = vmatpush1.msra.mxu0 %v2295
    %2327 = vmatprep.subr.mxu0 0.0
    %2328 = vmatpush1.msra.mxu0 %v1280
    %2329 = vmatprep.subr.mxu0 0.0
    %2330 = vmatpush2.msra.mxu0 0.0
    %2331 = vmatprep.subr.mxu0 0.0
    %2332 = vmatpush2.msra.mxu0 0.0
    %2333 = vmatprep.subr.mxu0 0.0
    %2334 = vmatpush2.msra.mxu0 0.0
    %2335 = vmatprep.subr.mxu0 0.0
    %2336 = vmatpush2.msra.mxu0 0.0
    %2337 = vmatprep.subr.mxu0 0.0
    %2338 = vmatpush2.msra.mxu0 0.0
    %2339 = vmatprep.subr.mxu0 0.0
    %2340 = vmatpush2.msra.mxu0 0.0
    %2341 = vmatprep.subr.mxu0 0.0
    %2342 = vmatpush2.msra.mxu0 0.0
    %2343 = vmatprep.subr.mxu0 0.0
    %2344 = vmatpush2.msra.mxu0 0.0
    %2345 = vmatprep.subr.mxu0 0.0
    %2346 = vmatpush2.msra.mxu0 0.0
    %2347 = vmatprep.subr.mxu0 0.0
    %2348 = vmatpush2.msra.mxu0 0.0
    %2349 = vmatprep.subr.mxu0 0.0
    %2350 = vmatpush2.msra.mxu0 0.0
    %2351 = vmatprep.subr.mxu0 0.0
    %2352 = vmatpush2.msra.mxu0 0.0
    %2353 = vmatprep.subr.mxu0 0.0
    %2354 = vmatpush2.msra.mxu0 0.0
    %2355 = vmatprep.subr.mxu0 0.0
    %2356 = vmatpush2.msra.mxu0 0.0
    %2357 = vmatprep.subr.mxu0 0.0
    %2358 = vmatpush2.msra.mxu0 0.0
    %2359 = vmatprep.subr.mxu0 0.0
    %2360 = vmatpush2.msra.mxu0 0.0
    %2361 = vmatprep.mubr.f32.mxu0 0.0
    %2362 = vmatmul.mubr.f32.gmra.mxu0 %v2292
    %v2363 = vpop.f32.mrf.mxu0
    %v2364 = vadd.f32 0.0, %v2363
    %v2365 = vpop.f32.mrf.mxu0
    %2366 = vdwg.mxu0
    %v2368 = vsel %vm2049, %v2133, 0
    %v2371 = vsel %vm2141, %v1314, 0
    %2373 = vmatprep.subr.mxu0 0.0
    %2374 = vmatpush1.msra.mxu0 0.0
    %2375 = vmatprep.subr.mxu0 0.0
    %2376 = vmatpush1.msra.mxu0 0.0
    %2377 = vmatprep.subr.mxu0 0.0
    %2378 = vmatpush1.msra.mxu0 0.0
    %2379 = vmatprep.subr.mxu0 0.0
    %2380 = vmatpush1.msra.mxu0 0.0
    %2381 = vmatprep.subr.mxu0 0.0
    %2382 = vmatpush1.msra.mxu0 0.0
    %2383 = vmatprep.subr.mxu0 0.0
    %2384 = vmatpush1.msra.mxu0 0.0
    %2385 = vmatprep.subr.mxu0 0.0
    %2386 = vmatpush1.msra.mxu0 0.0
    %2387 = vmatprep.subr.mxu0 0.0
    %2388 = vmatpush1.msra.mxu0 0.0
    %2389 = vmatprep.subr.mxu0 0.0
    %2390 = vmatpush1.msra.mxu0 0.0
    %2391 = vmatprep.subr.mxu0 0.0
    %2392 = vmatpush1.msra.mxu0 0.0
    %2393 = vmatprep.subr.mxu0 0.0
    %2394 = vmatpush1.msra.mxu0 0.0
    %2395 = vmatprep.subr.mxu0 0.0
    %2396 = vmatpush1.msra.mxu0 0.0
    %2397 = vmatprep.subr.mxu0 0.0
    %2398 = vmatpush1.msra.mxu0 0.0
    %2399 = vmatprep.subr.mxu0 0.0
    %2400 = vmatpush1.msra.mxu0 0.0
    %2401 = vmatprep.subr.mxu0 0.0
    %2402 = vmatpush1.msra.mxu0 %v2371
    %2403 = vmatprep.subr.mxu0 0.0
    %2404 = vmatpush1.msra.mxu0 %v1281
    %2405 = vmatprep.subr.mxu0 0.0
    %2406 = vmatpush2.msra.mxu0 0.0
    %2407 = vmatprep.subr.mxu0 0.0
    %2408 = vmatpush2.msra.mxu0 0.0
    %2409 = vmatprep.subr.mxu0 0.0
    %2410 = vmatpush2.msra.mxu0 0.0
    %2411 = vmatprep.subr.mxu0 0.0
    %2412 = vmatpush2.msra.mxu0 0.0
    %2413 = vmatprep.subr.mxu0 0.0
    %2414 = vmatpush2.msra.mxu0 0.0
    %2415 = vmatprep.subr.mxu0 0.0
    %2416 = vmatpush2.msra.mxu0 0.0
    %2417 = vmatprep.subr.mxu0 0.0
    %2418 = vmatpush2.msra.mxu0 0.0
    %2419 = vmatprep.subr.mxu0 0.0
    %2420 = vmatpush2.msra.mxu0 0.0
    %2421 = vmatprep.subr.mxu0 0.0
    %2422 = vmatpush2.msra.mxu0 0.0
    %2423 = vmatprep.subr.mxu0 0.0
    %2424 = vmatpush2.msra.mxu0 0.0
    %2425 = vmatprep.subr.mxu0 0.0
    %2426 = vmatpush2.msra.mxu0 0.0
    %2427 = vmatprep.subr.mxu0 0.0
    %2428 = vmatpush2.msra.mxu0 0.0
    %2429 = vmatprep.subr.mxu0 0.0
    %2430 = vmatpush2.msra.mxu0 0.0
    %2431 = vmatprep.subr.mxu0 0.0
    %2432 = vmatpush2.msra.mxu0 0.0
    %2433 = vmatprep.subr.mxu0 0.0
    %2434 = vmatpush2.msra.mxu0 0.0
    %2435 = vmatprep.subr.mxu0 0.0
    %2436 = vmatpush2.msra.mxu0 0.0
    %2437 = vmatprep.mubr.f32.mxu0 0.0
    %2438 = vmatmul.mubr.f32.gmra.mxu0 %v2368
    %v2439 = vpop.f32.mrf.mxu0
    %v2440 = vadd.f32 0.0, %v2439
    %v2441 = vpop.f32.mrf.mxu0
    %2442 = vdwg.mxu0
    %v2444 = vsel %vm2049, %v2134, 0
    %v2447 = vsel %vm2141, %v1406, 0
    %2449 = vmatprep.subr.mxu0 0.0
    %2450 = vmatpush1.msra.mxu0 0.0
    %2451 = vmatprep.subr.mxu0 0.0
    %2452 = vmatpush1.msra.mxu0 0.0
    %2453 = vmatprep.subr.mxu0 0.0
    %2454 = vmatpush1.msra.mxu0 0.0
    %2455 = vmatprep.subr.mxu0 0.0
    %2456 = vmatpush1.msra.mxu0 0.0
    %2457 = vmatprep.subr.mxu0 0.0
    %2458 = vmatpush1.msra.mxu0 0.0
    %2459 = vmatprep.subr.mxu0 0.0
    %2460 = vmatpush1.msra.mxu0 0.0
    %2461 = vmatprep.subr.mxu0 0.0
    %2462 = vmatpush1.msra.mxu0 0.0
    %2463 = vmatprep.subr.mxu0 0.0
    %2464 = vmatpush1.msra.mxu0 0.0
    %2465 = vmatprep.subr.mxu0 0.0
    %2466 = vmatpush1.msra.mxu0 0.0
    %2467 = vmatprep.subr.mxu0 0.0
    %2468 = vmatpush1.msra.mxu0 0.0
    %2469 = vmatprep.subr.mxu0 0.0
    %2470 = vmatpush1.msra.mxu0 0.0
    %2471 = vmatprep.subr.mxu0 0.0
    %2472 = vmatpush1.msra.mxu0 0.0
    %2473 = vmatprep.subr.mxu0 0.0
    %2474 = vmatpush1.msra.mxu0 0.0
    %2475 = vmatprep.subr.mxu0 0.0
    %2476 = vmatpush1.msra.mxu0 0.0
    %2477 = vmatprep.subr.mxu0 0.0
    %2478 = vmatpush1.msra.mxu0 %v2447
    %2479 = vmatprep.subr.mxu0 0.0
    %2480 = vmatpush1.msra.mxu0 %v1379
    %2481 = vmatprep.subr.mxu0 0.0
    %2482 = vmatpush2.msra.mxu0 0.0
    %2483 = vmatprep.subr.mxu0 0.0
    %2484 = vmatpush2.msra.mxu0 0.0
    %2485 = vmatprep.subr.mxu0 0.0
    %2486 = vmatpush2.msra.mxu0 0.0
    %2487 = vmatprep.subr.mxu0 0.0
    %2488 = vmatpush2.msra.mxu0 0.0
    %2489 = vmatprep.subr.mxu0 0.0
    %2490 = vmatpush2.msra.mxu0 0.0
    %2491 = vmatprep.subr.mxu0 0.0
    %2492 = vmatpush2.msra.mxu0 0.0
    %2493 = vmatprep.subr.mxu0 0.0
    %2494 = vmatpush2.msra.mxu0 0.0
    %2495 = vmatprep.subr.mxu0 0.0
    %2496 = vmatpush2.msra.mxu0 0.0
    %2497 = vmatprep.subr.mxu0 0.0
    %2498 = vmatpush2.msra.mxu0 0.0
    %2499 = vmatprep.subr.mxu0 0.0
    %2500 = vmatpush2.msra.mxu0 0.0
    %2501 = vmatprep.subr.mxu0 0.0
    %2502 = vmatpush2.msra.mxu0 0.0
    %2503 = vmatprep.subr.mxu0 0.0
    %2504 = vmatpush2.msra.mxu0 0.0
    %2505 = vmatprep.subr.mxu0 0.0
    %2506 = vmatpush2.msra.mxu0 0.0
    %2507 = vmatprep.subr.mxu0 0.0
    %2508 = vmatpush2.msra.mxu0 0.0
    %2509 = vmatprep.subr.mxu0 0.0
    %2510 = vmatpush2.msra.mxu0 0.0
    %2511 = vmatprep.subr.mxu0 0.0
    %2512 = vmatpush2.msra.mxu0 0.0
    %2513 = vmatprep.mubr.f32.mxu0 0.0
    %2514 = vmatmul.mubr.f32.gmra.mxu0 %v2444
    %v2515 = vpop.f32.mrf.mxu0
    %v2516 = vadd.f32 0.0, %v2515
    %v2517 = vpop.f32.mrf.mxu0
    %2518 = vdwg.mxu0
    %v2520 = vsel %vm2049, %v2135, 0
    %v2523 = vsel %vm2141, %v1414, 0
    %2525 = vmatprep.subr.mxu0 0.0
    %2526 = vmatpush1.msra.mxu0 0.0
    %2527 = vmatprep.subr.mxu0 0.0
    %2528 = vmatpush1.msra.mxu0 0.0
    %2529 = vmatprep.subr.mxu0 0.0
    %2530 = vmatpush1.msra.mxu0 0.0
    %2531 = vmatprep.subr.mxu0 0.0
    %2532 = vmatpush1.msra.mxu0 0.0
    %2533 = vmatprep.subr.mxu0 0.0
    %2534 = vmatpush1.msra.mxu0 0.0
    %2535 = vmatprep.subr.mxu0 0.0
    %2536 = vmatpush1.msra.mxu0 0.0
    %2537 = vmatprep.subr.mxu0 0.0
    %2538 = vmatpush1.msra.mxu0 0.0
    %2539 = vmatprep.subr.mxu0 0.0
    %2540 = vmatpush1.msra.mxu0 0.0
    %2541 = vmatprep.subr.mxu0 0.0
    %2542 = vmatpush1.msra.mxu0 0.0
    %2543 = vmatprep.subr.mxu0 0.0
    %2544 = vmatpush1.msra.mxu0 0.0
    %2545 = vmatprep.subr.mxu0 0.0
    %2546 = vmatpush1.msra.mxu0 0.0
    %2547 = vmatprep.subr.mxu0 0.0
    %2548 = vmatpush1.msra.mxu0 0.0
    %2549 = vmatprep.subr.mxu0 0.0
    %2550 = vmatpush1.msra.mxu0 0.0
    %2551 = vmatprep.subr.mxu0 0.0
    %2552 = vmatpush1.msra.mxu0 0.0
    %2553 = vmatprep.subr.mxu0 0.0
    %2554 = vmatpush1.msra.mxu0 %v2523
    %2555 = vmatprep.subr.mxu0 0.0
    %2556 = vmatpush1.msra.mxu0 %v1380
    %2557 = vmatprep.subr.mxu0 0.0
    %2558 = vmatpush2.msra.mxu0 0.0
    %2559 = vmatprep.subr.mxu0 0.0
    %2560 = vmatpush2.msra.mxu0 0.0
    %2561 = vmatprep.subr.mxu0 0.0
    %2562 = vmatpush2.msra.mxu0 0.0
    %2563 = vmatprep.subr.mxu0 0.0
    %2564 = vmatpush2.msra.mxu0 0.0
    %2565 = vmatprep.subr.mxu0 0.0
    %2566 = vmatpush2.msra.mxu0 0.0
    %2567 = vmatprep.subr.mxu0 0.0
    %2568 = vmatpush2.msra.mxu0 0.0
    %2569 = vmatprep.subr.mxu0 0.0
    %2570 = vmatpush2.msra.mxu0 0.0
    %2571 = vmatprep.subr.mxu0 0.0
    %2572 = vmatpush2.msra.mxu0 0.0
    %2573 = vmatprep.subr.mxu0 0.0
    %2574 = vmatpush2.msra.mxu0 0.0
    %2575 = vmatprep.subr.mxu0 0.0
    %2576 = vmatpush2.msra.mxu0 0.0
    %2577 = vmatprep.subr.mxu0 0.0
    %2578 = vmatpush2.msra.mxu0 0.0
    %2579 = vmatprep.subr.mxu0 0.0
    %2580 = vmatpush2.msra.mxu0 0.0
    %2581 = vmatprep.subr.mxu0 0.0
    %2582 = vmatpush2.msra.mxu0 0.0
    %2583 = vmatprep.subr.mxu0 0.0
    %2584 = vmatpush2.msra.mxu0 0.0
    %2585 = vmatprep.subr.mxu0 0.0
    %2586 = vmatpush2.msra.mxu0 0.0
    %2587 = vmatprep.subr.mxu0 0.0
    %2588 = vmatpush2.msra.mxu0 0.0
    %2589 = vmatprep.mubr.f32.mxu0 0.0
    %2590 = vmatmul.mubr.f32.gmra.mxu0 %v2520
    %v2591 = vpop.f32.mrf.mxu0
    %v2592 = vadd.f32 0.0, %v2591
    %v2593 = vpop.f32.mrf.mxu0
    %2594 = vdwg.mxu0
    %v2596 = vsel %vm2049, %v2136, 0
    %v2599 = vsel %vm2141, %v1413, 0
    %2601 = vmatprep.subr.mxu0 0.0
    %2602 = vmatpush1.msra.mxu0 0.0
    %2603 = vmatprep.subr.mxu0 0.0
    %2604 = vmatpush1.msra.mxu0 0.0
    %2605 = vmatprep.subr.mxu0 0.0
    %2606 = vmatpush1.msra.mxu0 0.0
    %2607 = vmatprep.subr.mxu0 0.0
    %2608 = vmatpush1.msra.mxu0 0.0
    %2609 = vmatprep.subr.mxu0 0.0
    %2610 = vmatpush1.msra.mxu0 0.0
    %2611 = vmatprep.subr.mxu0 0.0
    %2612 = vmatpush1.msra.mxu0 0.0
    %2613 = vmatprep.subr.mxu0 0.0
    %2614 = vmatpush1.msra.mxu0 0.0
    %2615 = vmatprep.subr.mxu0 0.0
    %2616 = vmatpush1.msra.mxu0 0.0
    %2617 = vmatprep.subr.mxu0 0.0
    %2618 = vmatpush1.msra.mxu0 0.0
    %2619 = vmatprep.subr.mxu0 0.0
    %2620 = vmatpush1.msra.mxu0 0.0
    %2621 = vmatprep.subr.mxu0 0.0
    %2622 = vmatpush1.msra.mxu0 0.0
    %2623 = vmatprep.subr.mxu0 0.0
    %2624 = vmatpush1.msra.mxu0 0.0
    %2625 = vmatprep.subr.mxu0 0.0
    %2626 = vmatpush1.msra.mxu0 0.0
    %2627 = vmatprep.subr.mxu0 0.0
    %2628 = vmatpush1.msra.mxu0 0.0
    %2629 = vmatprep.subr.mxu0 0.0
    %2630 = vmatpush1.msra.mxu0 %v2599
    %2631 = vmatprep.subr.mxu0 0.0
    %2632 = vmatpush1.msra.mxu0 %v1381
    %2633 = vmatprep.subr.mxu0 0.0
    %2634 = vmatpush2.msra.mxu0 0.0
    %2635 = vmatprep.subr.mxu0 0.0
    %2636 = vmatpush2.msra.mxu0 0.0
    %2637 = vmatprep.subr.mxu0 0.0
    %2638 = vmatpush2.msra.mxu0 0.0
    %2639 = vmatprep.subr.mxu0 0.0
    %2640 = vmatpush2.msra.mxu0 0.0
    %2641 = vmatprep.subr.mxu0 0.0
    %2642 = vmatpush2.msra.mxu0 0.0
    %2643 = vmatprep.subr.mxu0 0.0
    %2644 = vmatpush2.msra.mxu0 0.0
    %2645 = vmatprep.subr.mxu0 0.0
    %2646 = vmatpush2.msra.mxu0 0.0
    %2647 = vmatprep.subr.mxu0 0.0
    %2648 = vmatpush2.msra.mxu0 0.0
    %2649 = vmatprep.subr.mxu0 0.0
    %2650 = vmatpush2.msra.mxu0 0.0
    %2651 = vmatprep.subr.mxu0 0.0
    %2652 = vmatpush2.msra.mxu0 0.0
    %2653 = vmatprep.subr.mxu0 0.0
    %2654 = vmatpush2.msra.mxu0 0.0
    %2655 = vmatprep.subr.mxu0 0.0
    %2656 = vmatpush2.msra.mxu0 0.0
    %2657 = vmatprep.subr.mxu0 0.0
    %2658 = vmatpush2.msra.mxu0 0.0
    %2659 = vmatprep.subr.mxu0 0.0
    %2660 = vmatpush2.msra.mxu0 0.0
    %2661 = vmatprep.subr.mxu0 0.0
    %2662 = vmatpush2.msra.mxu0 0.0
    %2663 = vmatprep.subr.mxu0 0.0
    %2664 = vmatpush2.msra.mxu0 0.0
    %2665 = vmatprep.mubr.f32.mxu0 0.0
    %2666 = vmatmul.mubr.f32.gmra.mxu0 %v2596
    %v2667 = vpop.f32.mrf.mxu0
    %v2668 = vadd.f32 0.0, %v2667
    %v2669 = vpop.f32.mrf.mxu0
    %2670 = vdwg.mxu0
    %v2672 = vsel %vm2049, %v2137, 0
    %v2675 = vsel %vm2141, %v1415, 0
    %2677 = vmatprep.subr.mxu0 0.0
    %2678 = vmatpush1.msra.mxu0 0.0
    %2679 = vmatprep.subr.mxu0 0.0
    %2680 = vmatpush1.msra.mxu0 0.0
    %2681 = vmatprep.subr.mxu0 0.0
    %2682 = vmatpush1.msra.mxu0 0.0
    %2683 = vmatprep.subr.mxu0 0.0
    %2684 = vmatpush1.msra.mxu0 0.0
    %2685 = vmatprep.subr.mxu0 0.0
    %2686 = vmatpush1.msra.mxu0 0.0
    %2687 = vmatprep.subr.mxu0 0.0
    %2688 = vmatpush1.msra.mxu0 0.0
    %2689 = vmatprep.subr.mxu0 0.0
    %2690 = vmatpush1.msra.mxu0 0.0
    %2691 = vmatprep.subr.mxu0 0.0
    %2692 = vmatpush1.msra.mxu0 0.0
    %2693 = vmatprep.subr.mxu0 0.0
    %2694 = vmatpush1.msra.mxu0 0.0
    %2695 = vmatprep.subr.mxu0 0.0
    %2696 = vmatpush1.msra.mxu0 0.0
    %2697 = vmatprep.subr.mxu0 0.0
    %2698 = vmatpush1.msra.mxu0 0.0
    %2699 = vmatprep.subr.mxu0 0.0
    %2700 = vmatpush1.msra.mxu0 0.0
    %2701 = vmatprep.subr.mxu0 0.0
    %2702 = vmatpush1.msra.mxu0 0.0
    %2703 = vmatprep.subr.mxu0 0.0
    %2704 = vmatpush1.msra.mxu0 0.0
    %2705 = vmatprep.subr.mxu0 0.0
    %2706 = vmatpush1.msra.mxu0 %v2675
    %2707 = vmatprep.subr.mxu0 0.0
    %2708 = vmatpush1.msra.mxu0 %v1382
    %2709 = vmatprep.subr.mxu0 0.0
    %2710 = vmatpush2.msra.mxu0 0.0
    %2711 = vmatprep.subr.mxu0 0.0
    %2712 = vmatpush2.msra.mxu0 0.0
    %2713 = vmatprep.subr.mxu0 0.0
    %2714 = vmatpush2.msra.mxu0 0.0
    %2715 = vmatprep.subr.mxu0 0.0
    %2716 = vmatpush2.msra.mxu0 0.0
    %2717 = vmatprep.subr.mxu0 0.0
    %2718 = vmatpush2.msra.mxu0 0.0
    %2719 = vmatprep.subr.mxu0 0.0
    %2720 = vmatpush2.msra.mxu0 0.0
    %2721 = vmatprep.subr.mxu0 0.0
    %2722 = vmatpush2.msra.mxu0 0.0
    %2723 = vmatprep.subr.mxu0 0.0
    %2724 = vmatpush2.msra.mxu0 0.0
    %2725 = vmatprep.subr.mxu0 0.0
    %2726 = vmatpush2.msra.mxu0 0.0
    %2727 = vmatprep.subr.mxu0 0.0
    %2728 = vmatpush2.msra.mxu0 0.0
    %2729 = vmatprep.subr.mxu0 0.0
    %2730 = vmatpush2.msra.mxu0 0.0
    %2731 = vmatprep.subr.mxu0 0.0
    %2732 = vmatpush2.msra.mxu0 0.0
    %2733 = vmatprep.subr.mxu0 0.0
    %2734 = vmatpush2.msra.mxu0 0.0
    %2735 = vmatprep.subr.mxu0 0.0
    %2736 = vmatpush2.msra.mxu0 0.0
    %2737 = vmatprep.subr.mxu0 0.0
    %2738 = vmatpush2.msra.mxu0 0.0
    %2739 = vmatprep.subr.mxu0 0.0
    %2740 = vmatpush2.msra.mxu0 0.0
    %2741 = vmatprep.mubr.f32.mxu0 0.0
    %2742 = vmatmul.mubr.f32.gmra.mxu0 %v2672
    %v2743 = vpop.f32.mrf.mxu0
    %v2744 = vadd.f32 0.0, %v2743
    %v2745 = vpop.f32.mrf.mxu0
    %2746 = vdwg.mxu0
    %v2747 = vcombine.low %v2212, %v2364
    %v2748 = vcombine.high %v2212, %v2364
    %v2750 = vunpack.c.l.s4 1983009808
    %v2751 = vunpack.c.0.s8 %v2750
    %v2752 = vlaneseq
    %v2753 = vshrl.u32 %v2752, 7
    %v2754 = vsub.s32 %v2751, %v2753
    %v2755 = vrot.slane %v2747, %v2754
    %v2757 = vunpack.c.l.s4 1983009808
    %v2758 = vunpack.c.0.s8 %v2757
    %v2759 = vlaneseq
    %v2760 = vshrl.u32 %v2759, 7
    %v2761 = vsub.s32 %v2758, %v2760
    %v2762 = vrot.slane %v2748, %v2761
    %v2763 = vcombine.low %v2288, %v2440
    %v2764 = vcombine.high %v2288, %v2440
    %v2766 = vunpack.c.l.s4 1983009808
    %v2767 = vunpack.c.0.s8 %v2766
    %v2768 = vlaneseq
    %v2769 = vshrl.u32 %v2768, 7
    %v2770 = vsub.s32 %v2767, %v2769
    %v2771 = vrot.slane %v2763, %v2770
    %v2773 = vunpack.c.l.s4 1983009808
    %v2774 = vunpack.c.0.s8 %v2773
    %v2775 = vlaneseq
    %v2776 = vshrl.u32 %v2775, 7
    %v2777 = vsub.s32 %v2774, %v2776
    %v2778 = vrot.slane %v2764, %v2777
    %v2779 = vcombine.low %v2755, %v2771
    %v2780 = vcombine.high %v2755, %v2771
    %v2782 = vunpack.c.l.s4 1934713408
    %v2783 = vunpack.c.0.s8 %v2782
    %v2784 = vlaneseq
    %v2785 = vshrl.u32 %v2784, 7
    %v2786 = vsub.s32 %v2783, %v2785
    %v2787 = vrot.slane %v2779, %v2786
    %v2789 = vunpack.c.l.s4 1934713408
    %v2790 = vunpack.c.0.s8 %v2789
    %v2791 = vlaneseq
    %v2792 = vshrl.u32 %v2791, 7
    %v2793 = vsub.s32 %v2790, %v2792
    %v2794 = vrot.slane %v2780, %v2793
    %v2795 = vcombine.low %v2762, %v2778
    %v2796 = vcombine.high %v2762, %v2778
    %v2798 = vunpack.c.l.s4 1934713408
    %v2799 = vunpack.c.0.s8 %v2798
    %v2800 = vlaneseq
    %v2801 = vshrl.u32 %v2800, 7
    %v2802 = vsub.s32 %v2799, %v2801
    %v2803 = vrot.slane %v2795, %v2802
    %v2805 = vunpack.c.l.s4 1934713408
    %v2806 = vunpack.c.0.s8 %v2805
    %v2807 = vlaneseq
    %v2808 = vshrl.u32 %v2807, 7
    %v2809 = vsub.s32 %v2806, %v2808
    %v2810 = vrot.slane %v2796, %v2809
    %v2811 = vcombine.high %v2787, 0.0
    %v2812 = vcombine.high %v2794, 0.0
    %v2813 = vcombine.high %v2803, 0.0
    %v2814 = vcombine.high %v2810, 0.0
    %v2815 = vcombine.low %v2516, %v2668
    %v2816 = vcombine.high %v2516, %v2668
    %v2818 = vunpack.c.l.s4 1983009808
    %v2819 = vunpack.c.0.s8 %v2818
    %v2820 = vlaneseq
    %v2821 = vshrl.u32 %v2820, 7
    %v2822 = vsub.s32 %v2819, %v2821
    %v2823 = vrot.slane %v2815, %v2822
    %v2825 = vunpack.c.l.s4 1983009808
    %v2826 = vunpack.c.0.s8 %v2825
    %v2827 = vlaneseq
    %v2828 = vshrl.u32 %v2827, 7
    %v2829 = vsub.s32 %v2826, %v2828
    %v2830 = vrot.slane %v2816, %v2829
    %v2831 = vcombine.low %v2592, %v2744
    %v2832 = vcombine.high %v2592, %v2744
    %v2834 = vunpack.c.l.s4 1983009808
    %v2835 = vunpack.c.0.s8 %v2834
    %v2836 = vlaneseq
    %v2837 = vshrl.u32 %v2836, 7
    %v2838 = vsub.s32 %v2835, %v2837
    %v2839 = vrot.slane %v2831, %v2838
    %v2841 = vunpack.c.l.s4 1983009808
    %v2842 = vunpack.c.0.s8 %v2841
    %v2843 = vlaneseq
    %v2844 = vshrl.u32 %v2843, 7
    %v2845 = vsub.s32 %v2842, %v2844
    %v2846 = vrot.slane %v2832, %v2845
    %v2847 = vcombine.low %v2823, %v2839
    %v2848 = vcombine.high %v2823, %v2839
    %v2850 = vunpack.c.l.s4 1934713408
    %v2851 = vunpack.c.0.s8 %v2850
    %v2852 = vlaneseq
    %v2853 = vshrl.u32 %v2852, 7
    %v2854 = vsub.s32 %v2851, %v2853
    %v2855 = vrot.slane %v2847, %v2854
    %v2857 = vunpack.c.l.s4 1934713408
    %v2858 = vunpack.c.0.s8 %v2857
    %v2859 = vlaneseq
    %v2860 = vshrl.u32 %v2859, 7
    %v2861 = vsub.s32 %v2858, %v2860
    %v2862 = vrot.slane %v2848, %v2861
    %v2863 = vcombine.low %v2830, %v2846
    %v2864 = vcombine.high %v2830, %v2846
    %v2866 = vunpack.c.l.s4 1934713408
    %v2867 = vunpack.c.0.s8 %v2866
    %v2868 = vlaneseq
    %v2869 = vshrl.u32 %v2868, 7
    %v2870 = vsub.s32 %v2867, %v2869
    %v2871 = vrot.slane %v2863, %v2870
    %v2873 = vunpack.c.l.s4 1934713408
    %v2874 = vunpack.c.0.s8 %v2873
    %v2875 = vlaneseq
    %v2876 = vshrl.u32 %v2875, 7
    %v2877 = vsub.s32 %v2874, %v2876
    %v2878 = vrot.slane %v2864, %v2877
    %v2879 = vcombine.high %v2855, 0.0
    %v2880 = vcombine.high %v2862, 0.0
    %v2881 = vcombine.high %v2871, 0.0
    %v2882 = vcombine.high %v2878, 0.0
    %v2883 = vcombine.low %v2787, %v2794
    %v2885 = vunpack.c.l.s4 1983009808
    %v2886 = vunpack.c.0.s8 %v2885
    %v2887 = vlaneseq
    %v2888 = vshrl.u32 %v2887, 7
    %v2889 = vsub.s32 %v2886, %v2888
    %v2890 = vrot.slane %v2883, %v2889
    %v2891 = vcombine.low %v2811, %v2812
    %v2893 = vunpack.c.l.s4 1983009808
    %v2894 = vunpack.c.0.s8 %v2893
    %v2895 = vlaneseq
    %v2896 = vshrl.u32 %v2895, 7
    %v2897 = vsub.s32 %v2894, %v2896
    %v2898 = vrot.slane %v2891, %v2897
    %v2899 = vcombine.low %v2803, %v2810
    %v2901 = vunpack.c.l.s4 1983009808
    %v2902 = vunpack.c.0.s8 %v2901
    %v2903 = vlaneseq
    %v2904 = vshrl.u32 %v2903, 7
    %v2905 = vsub.s32 %v2902, %v2904
    %v2906 = vrot.slane %v2899, %v2905
    %v2907 = vcombine.low %v2813, %v2814
    %v2909 = vunpack.c.l.s4 1983009808
    %v2910 = vunpack.c.0.s8 %v2909
    %v2911 = vlaneseq
    %v2912 = vshrl.u32 %v2911, 7
    %v2913 = vsub.s32 %v2910, %v2912
    %v2914 = vrot.slane %v2907, %v2913
    %v2915 = vcombine.low %v2890, %v2898
    %v2916 = vcombine.high %v2890, %v2898
    %v2918 = vunpack.c.l.s4 1934713408
    %v2919 = vunpack.c.0.s8 %v2918
    %v2920 = vlaneseq
    %v2921 = vshrl.u32 %v2920, 7
    %v2922 = vsub.s32 %v2919, %v2921
    %v2923 = vrot.slane %v2915, %v2922
    %v2925 = vunpack.c.l.s4 1934713408
    %v2926 = vunpack.c.0.s8 %v2925
    %v2927 = vlaneseq
    %v2928 = vshrl.u32 %v2927, 7
    %v2929 = vsub.s32 %v2926, %v2928
    %v2930 = vrot.slane %v2916, %v2929
    %v2931 = vcombine.low %v2906, %v2914
    %v2932 = vcombine.high %v2906, %v2914
    %v2934 = vunpack.c.l.s4 1934713408
    %v2935 = vunpack.c.0.s8 %v2934
    %v2936 = vlaneseq
    %v2937 = vshrl.u32 %v2936, 7
    %v2938 = vsub.s32 %v2935, %v2937
    %v2939 = vrot.slane %v2931, %v2938
    %v2941 = vunpack.c.l.s4 1934713408
    %v2942 = vunpack.c.0.s8 %v2941
    %v2943 = vlaneseq
    %v2944 = vshrl.u32 %v2943, 7
    %v2945 = vsub.s32 %v2942, %v2944
    %v2946 = vrot.slane %v2932, %v2945
    %v2947 = vcombine.low %v2923, %v2939
    %v2948 = vcombine.high %v2923, %v2939
    %v2949 = vcombine.low %v2930, %v2946
    %v2950 = vcombine.high %v2930, %v2946
    %v2951 = vcombine.low %v2855, %v2862
    %v2953 = vunpack.c.l.s4 1983009808
    %v2954 = vunpack.c.0.s8 %v2953
    %v2955 = vlaneseq
    %v2956 = vshrl.u32 %v2955, 7
    %v2957 = vsub.s32 %v2954, %v2956
    %v2958 = vrot.slane %v2951, %v2957
    %v2959 = vcombine.low %v2879, %v2880
    %v2961 = vunpack.c.l.s4 1983009808
    %v2962 = vunpack.c.0.s8 %v2961
    %v2963 = vlaneseq
    %v2964 = vshrl.u32 %v2963, 7
    %v2965 = vsub.s32 %v2962, %v2964
    %v2966 = vrot.slane %v2959, %v2965
    %v2967 = vcombine.low %v2871, %v2878
    %v2969 = vunpack.c.l.s4 1983009808
    %v2970 = vunpack.c.0.s8 %v2969
    %v2971 = vlaneseq
    %v2972 = vshrl.u32 %v2971, 7
    %v2973 = vsub.s32 %v2970, %v2972
    %v2974 = vrot.slane %v2967, %v2973
    %v2975 = vcombine.low %v2881, %v2882
    %v2977 = vunpack.c.l.s4 1983009808
    %v2978 = vunpack.c.0.s8 %v2977
    %v2979 = vlaneseq
    %v2980 = vshrl.u32 %v2979, 7
    %v2981 = vsub.s32 %v2978, %v2980
    %v2982 = vrot.slane %v2975, %v2981
    %v2983 = vcombine.low %v2958, %v2966
    %v2984 = vcombine.high %v2958, %v2966
    %v2986 = vunpack.c.l.s4 1934713408
    %v2987 = vunpack.c.0.s8 %v2986
    %v2988 = vlaneseq
    %v2989 = vshrl.u32 %v2988, 7
    %v2990 = vsub.s32 %v2987, %v2989
    %v2991 = vrot.slane %v2983, %v2990
    %v2993 = vunpack.c.l.s4 1934713408
    %v2994 = vunpack.c.0.s8 %v2993
    %v2995 = vlaneseq
    %v2996 = vshrl.u32 %v2995, 7
    %v2997 = vsub.s32 %v2994, %v2996
    %v2998 = vrot.slane %v2984, %v2997
    %v2999 = vcombine.low %v2974, %v2982
    %v3000 = vcombine.high %v2974, %v2982
    %v3002 = vunpack.c.l.s4 1934713408
    %v3003 = vunpack.c.0.s8 %v3002
    %v3004 = vlaneseq
    %v3005 = vshrl.u32 %v3004, 7
    %v3006 = vsub.s32 %v3003, %v3005
    %v3007 = vrot.slane %v2999, %v3006
    %v3009 = vunpack.c.l.s4 1934713408
    %v3010 = vunpack.c.0.s8 %v3009
    %v3011 = vlaneseq
    %v3012 = vshrl.u32 %v3011, 7
    %v3013 = vsub.s32 %v3010, %v3012
    %v3014 = vrot.slane %v3000, %v3013
    %v3015 = vcombine.low %v2991, %v3007
    %v3016 = vcombine.high %v2991, %v3007
    %v3017 = vcombine.low %v2998, %v3014
    %v3018 = vcombine.high %v2998, %v3014
    %3021 = vrot.lane.b32.xlu0 %v2948, 8
    %v3022 = vpop.permute.xlu0 %3021
    %3023 = vrot.lane.b32.xlu0 %v3016, 8
    %v3024 = vpop.permute.xlu0 %3023
    %3029 = vrot.lane.b32.xlu0 %v2949, 16
    %v3030 = vpop.permute.xlu0 %3029
    %3031 = vrot.lane.b32.xlu0 %v3017, 16
    %v3032 = vpop.permute.xlu0 %3031
    %3037 = vrot.lane.b32.xlu0 %v2950, 24
    %v3038 = vpop.permute.xlu0 %3037
    %3039 = vrot.lane.b32.xlu0 %v3018, 24
    %v3040 = vpop.permute.xlu0 %3039
    %v3043 = vsel %vm1416, %v2947, %v3022
    %v3044 = vsel %vm1416, %v3015, %v3024
    %v3045 = vsel %vm112, %v3043, %v3030
    %v3046 = vsel %vm112, %v3044, %v3032
    %v3047 = vsel %vm204, %v3045, %v3038
    %v3048 = vsel %vm204, %v3046, %v3040
    %v3049 = vadd.f32 %v186, %v3047
    %v3050 = vadd.f32 %v191, %v3048
    %v3051 = vld [vmem:[#allocation10] sm:$0xff]
    %v3052 = vld [vmem:[#allocation10 + $0x8] sm:$0xff]
    %v3053 = vld [vmem:[#allocation10 + $0x10] sm:$0xff]
    %v3054 = vld [vmem:[#allocation10 + $0x18] sm:$0xff]
    %v3055 = vld [vmem:[%s7] sm:$0x1]
    %v3057 = vlaneseq
    %v3058 = vshrl.u32 %v3057, 7
    %v3059 = vsub.s32 0, %v3058
    %v3060 = vrot.slane %v3055, %v3059
    %vm3062 = vcmask 261120
    %v3064 = vsel %vm3062, %v3049, 0
    %v3067 = vsel %vm3062, %v3050, 0
    %3069 = vmatprep.subr.mxu0 0.0
    %3070 = vmatpush1.msra.mxu0 0.0
    %3071 = vmatprep.subr.mxu0 0.0
    %3072 = vmatpush1.msra.mxu0 0.0
    %3073 = vmatprep.subr.mxu0 0.0
    %3074 = vmatpush1.msra.mxu0 0.0
    %3075 = vmatprep.subr.mxu0 0.0
    %3076 = vmatpush1.msra.mxu0 0.0
    %3077 = vmatprep.subr.mxu0 0.0
    %3078 = vmatpush1.msra.mxu0 0.0
    %3079 = vmatprep.subr.mxu0 0.0
    %3080 = vmatpush1.msra.mxu0 0.0
    %3081 = vmatprep.subr.mxu0 0.0
    %3082 = vmatpush1.msra.mxu0 0.0
    %3083 = vmatprep.subr.mxu0 0.0
    %3084 = vmatpush1.msra.mxu0 0.0
    %3085 = vmatprep.subr.mxu0 0.0
    %3086 = vmatpush1.msra.mxu0 0.0
    %3087 = vmatprep.subr.mxu0 0.0
    %3088 = vmatpush1.msra.mxu0 0.0
    %3089 = vmatprep.subr.mxu0 0.0
    %3090 = vmatpush1.msra.mxu0 0.0
    %3091 = vmatprep.subr.mxu0 0.0
    %3092 = vmatpush1.msra.mxu0 0.0
    %3093 = vmatprep.subr.mxu0 0.0
    %3094 = vmatpush1.msra.mxu0 %v3054
    %3095 = vmatprep.subr.mxu0 0.0
    %3096 = vmatpush1.msra.mxu0 %v3053
    %3097 = vmatprep.subr.mxu0 0.0
    %3098 = vmatpush1.msra.mxu0 %v3052
    %3099 = vmatprep.subr.mxu0 0.0
    %3100 = vmatpush1.msra.mxu0 %v3051
    %3101 = vmatprep.subr.mxu0 0.0
    %3102 = vmatpush2.msra.mxu0 0.0
    %3103 = vmatprep.subr.mxu0 0.0
    %3104 = vmatpush2.msra.mxu0 0.0
    %3105 = vmatprep.subr.mxu0 0.0
    %3106 = vmatpush2.msra.mxu0 0.0
    %3107 = vmatprep.subr.mxu0 0.0
    %3108 = vmatpush2.msra.mxu0 0.0
    %3109 = vmatprep.subr.mxu0 0.0
    %3110 = vmatpush2.msra.mxu0 0.0
    %3111 = vmatprep.subr.mxu0 0.0
    %3112 = vmatpush2.msra.mxu0 0.0
    %3113 = vmatprep.subr.mxu0 0.0
    %3114 = vmatpush2.msra.mxu0 0.0
    %3115 = vmatprep.subr.mxu0 0.0
    %3116 = vmatpush2.msra.mxu0 0.0
    %3117 = vmatprep.subr.mxu0 0.0
    %3118 = vmatpush2.msra.mxu0 0.0
    %3119 = vmatprep.subr.mxu0 0.0
    %3120 = vmatpush2.msra.mxu0 0.0
    %3121 = vmatprep.subr.mxu0 0.0
    %3122 = vmatpush2.msra.mxu0 0.0
    %3123 = vmatprep.subr.mxu0 0.0
    %3124 = vmatpush2.msra.mxu0 0.0
    %3125 = vmatprep.subr.mxu0 0.0
    %3126 = vmatpush2.msra.mxu0 0.0
    %3127 = vmatprep.subr.mxu0 0.0
    %3128 = vmatpush2.msra.mxu0 0.0
    %3129 = vmatprep.subr.mxu0 0.0
    %3130 = vmatpush2.msra.mxu0 0.0
    %3131 = vmatprep.subr.mxu0 0.0
    %3132 = vmatpush2.msra.mxu0 0.0
    %3133 = vmatprep.mubr.f32.mxu0 0.0
    %3134 = vmatmul.mubr.f32.gmra.mxu0 %v3064
    %v3135 = vpop.f32.mrf.mxu0
    %v3136 = vadd.f32 %v3060, %v3135
    %v3137 = vpop.f32.mrf.mxu0
    %3138 = vmatprep.mubr.f32.mxu0 0.0
    %3139 = vmatmul.mubr.f32.gmra.mxu0 %v3067
    %v3140 = vpop.f32.mrf.mxu0
    %v3141 = vadd.f32 %v3060, %v3140
    %v3142 = vpop.f32.mrf.mxu0
    %3143 = vdwg.mxu0
    %v3144 = vmax.f32 %v3136, 0.0
    %v3145 = vmax.f32 %v3141, 0.0
    %v3146 = vadd.f32 %v3049, %v3144
    %v3147 = vadd.f32 %v3050, %v3145
    %3148 = vst.msk [vmem:[#allocation11] sm:$0xff] %vm3062, %v3146
    %3149 = vst.msk [vmem:[#allocation11 + $0x8] sm:$0xff] %vm3062, %v3147
    // Predicated region
    $region54: #{tpu_custom_call.1} parent=1 // pred_check
      _
    $region55: #{tpu_custom_call.1} parent=1 // pred_check_branch
      %3151 = sbr.rel (0) target = $region57
    $region56: #{tpu_custom_call.1} parent=1 // pred_region
      %s3153 = ssub.s32 256, 256
      %3154 = vsyncadd [#allocation4], %s3153
      %s3155 = sshll.u32 [#allocation11], 4
      %s3156 = int_to_ptr.vmem [resolvable:$true] %s3155
      %3161 = dma.vmem_to_hbm [thread:$0]  %s3156, 256, %s8, [#allocation4], 128, 128, 8
    $region57: #{tpu_custom_call.1} parent=1 // pred_fallthru
      _
    // Predicated region
    $region58: #{tpu_custom_call.1} parent=1 // pred_check
      _
    $region59: #{tpu_custom_call.1} parent=1 // pred_check_branch
      %3163 = sbr.rel (0) target = $region61
    $region60: #{tpu_custom_call.1} parent=1 // pred_region
      %3164 = dma.done [#allocation4], 256
    $region61: #{tpu_custom_call.1} parent=1 // pred_fallthru
      _
    %3165 = vsyncpa [#allocation3], 1
    %3166 = vsyncpa [#allocation6], 1
    %3167 = vsyncpa [#allocation9], 1
    %3168 = vsyncpa [#allocation4], 1

</llo_original>
